<compile_context>
chip_gen: v7x
topology: tpu7x:2x2x1
jax: 0.10.0
libtpu: 0.0.40
codegen_flags: <defaults>
</compile_context>

<pallas_src>
import math
import functools

import jax
import jax.numpy as jnp
from jax.experimental import pallas as pl
from jax.experimental.pallas import tpu as pltpu

# ---------------- model hyper-parameters (small, consistent with the module) ----------
B = 2        # batch
S = 8        # sequence length
D = 32       # d_model ("size" in EncoderLayer)
H = 4        # attention heads
DK = D // H  # per-head dim
DFF = 64     # feed-forward hidden dim
EPS = 1e-6


# ---------------------------------- Pallas kernel ------------------------------------
def encoder_layer_kernel(x_ref, wslab_ref, vslab_ref, out_ref,
                         *, batch, seq, d_model, heads, dk, dff):
    bs = batch * seq
    x = x_ref[...].astype(jnp.float32)                       # (B*S, D)

    # ---- carve parameters out of the two packed slabs (static slices, zero cost) ----
    wqkv = wslab_ref[0:32, 0:96]                              # (D, 3*D)  [Q|K|V], scale folded
    wo   = wslab_ref[0:32, 96:128]                            # (D, D)
    w1   = wslab_ref[32:64, 0:64]                             # (D, DFF)
    w2   = wslab_ref[32:96, 64:96]                            # (DFF, D)

    ln1_a = vslab_ref[0:1, 0:32]
    ln1_b = vslab_ref[0:1, 32:64]
    ln2_a = vslab_ref[0:1, 64:96]
    ln2_b = vslab_ref[0:1, 96:128]
    bqkv  = vslab_ref[1:2, 0:96]                              # (1, 3*D)
    bo    = vslab_ref[1:2, 96:128]                            # (1, D)
    b1    = vslab_ref[2:3, 0:64]                              # (1, DFF)
    b2    = vslab_ref[2:3, 64:96]                             # (1, D)
    bias  = vslab_ref[8:8 + bs, 0:bs]                         # (B*S, B*S) additive attn bias

    def layer_norm(v, a, b):
        mean = jnp.mean(v, axis=-1, keepdims=True)
        # torch.std(-1) uses the unbiased estimator (ddof = 1)
        var = jnp.sum((v - mean) ** 2, axis=-1, keepdims=True) / (d_model - 1)
        std = jnp.sqrt(var)
        return a * (v - mean) * pl.reciprocal(std + EPS, approx=False) + b

    # ---- sublayer 0: multi-head self-attention on LayerNorm1(x) ----
    y = layer_norm(x, ln1_a, ln1_b)                           # (B*S, D)

    # single fused Q/K/V projection: (16,32) x (32,96) -> (16,96)
    qkv = jnp.dot(y, wqkv, preferred_element_type=jnp.float32) + bqkv

    ctx_heads = []
    for h in range(heads):                                    # static lane slices per head
        q_h = qkv[:, h * dk:(h + 1) * dk]                     # (B*S, DK)  (already scaled)
        k_h = qkv[:, heads * dk + h * dk: heads * dk + (h + 1) * dk]
        v_h = qkv[:, 2 * heads * dk + h * dk: 2 * heads * dk + (h + 1) * dk]

        # scores = q_h @ k_h^T  (contract last dims), plus precomputed additive bias
        s = jax.lax.dot_general(q_h, k_h, (((1,), (1,)), ((), ())),
                                preferred_element_type=jnp.float32) + bias
        m = jnp.max(s, axis=-1, keepdims=True)
        e = jnp.exp(s - m)
        p = e * pl.reciprocal(jnp.sum(e, axis=-1, keepdims=True), approx=True)
        ctx_heads.append(jnp.dot(p, v_h, preferred_element_type=jnp.float32))

    ctx = jnp.concatenate(ctx_heads, axis=-1)                 # (B*S, D) head merge (lane place)
    attn = jnp.dot(ctx, wo, preferred_element_type=jnp.float32) + bo
    x = x + attn                                              # residual

    # ---- sublayer 1: position-wise feed-forward on LayerNorm2(x) ----
    y2 = layer_norm(x, ln2_a, ln2_b)
    h1 = jnp.maximum(jnp.dot(y2, w1, preferred_element_type=jnp.float32) + b1, 0.0)
    ff = jnp.dot(h1, w2, preferred_element_type=jnp.float32) + b2

    out_ref[...] = (x + ff).astype(out_ref.dtype)


# ---------------------------------- wrapper -------------------------------------------
def encoder_layer(x, mask, params):
    b, s, d = x.shape
    heads, dk, dff = H, DK, DFF
    bs = b * s
    scale = 1.0 / math.sqrt(dk)

    # ---- one-time parameter packing (plain XLA, outside the kernel) ----
    # weight slab: (96, 128)  [wqkv | wo] on rows 0..31, [w1 | w2] below
    wqkv = jnp.concatenate([params["wq"] * scale, params["wk"], params["wv"]], axis=1)  # (32,96)
    wslab = jnp.zeros((96, 128), jnp.float32)
    wslab = wslab.at[0:32, 0:96].set(wqkv)
    wslab = wslab.at[0:32, 96:128].set(params["wo"])
    wslab = wslab.at[32:64, 0:64].set(params["w1"])
    wslab = wslab.at[32:96, 64:96].set(params["w2"])

    # additive attention bias: -1e9 on masked key positions AND on cross-batch
    # (query, key) pairs, so the folded (B*S) row axis behaves exactly like
    # independent per-batch attention.  mask is (B,1,S) key-only.
    q_batch = (jnp.arange(bs) // s)[:, None]
    k_batch = (jnp.arange(bs) // s)[None, :]
    key_ok = (mask.reshape(bs) != 0)[None, :]
    ok = jnp.logical_and(q_batch == k_batch, key_ok)
    bias = jnp.where(ok, 0.0, -1e9).astype(jnp.float32)                                  # (bs,bs)

    # vector/bias slab: (24, 128)
    bqkv = jnp.concatenate([params["bq"] * scale, params["bk"], params["bv"]], axis=1)   # (1,96)
    vslab = jnp.zeros((24, 128), jnp.float32)
    vslab = vslab.at[0:1, 0:32].set(params["ln1_a"])
    vslab = vslab.at[0:1, 32:64].set(params["ln1_b"])
    vslab = vslab.at[0:1, 64:96].set(params["ln2_a"])
    vslab = vslab.at[0:1, 96:128].set(params["ln2_b"])
    vslab = vslab.at[1:2, 0:96].set(bqkv)
    vslab = vslab.at[1:2, 96:128].set(params["bo"])
    vslab = vslab.at[2:3, 0:64].set(params["b1"])
    vslab = vslab.at[2:3, 64:96].set(params["b2"])
    vslab = vslab.at[8:8 + bs, 0:bs].set(bias)

    kernel = functools.partial(encoder_layer_kernel, batch=b, seq=s,
                               d_model=d, heads=heads, dk=dk, dff=dff)

    vmem = pl.BlockSpec(memory_space=pltpu.MemorySpace.VMEM)        # whole array in VMEM

    out2d = pl.pallas_call(
        kernel,
        out_shape=jax.ShapeDtypeStruct((bs, d), jnp.float32),
        in_specs=[vmem, vmem, vmem],
        out_specs=vmem,
    )(x.reshape(bs, d), wslab, vslab)

    return out2d.reshape(b, s, d)


# ----------------------------- pure-JAX reference ------------------------------------
def encoder_layer_ref(x, mask, p):
    def ln(v, a, b):
        mean = jnp.mean(v, axis=-1, keepdims=True)
        std = jnp.sqrt(jnp.sum((v - mean) ** 2, axis=-1, keepdims=True) / (v.shape[-1] - 1))
        return a * (v - mean) / (std + EPS) + b

    y = ln(x, p["ln1_a"], p["ln1_b"])
    q = y @ p["wq"] + p["bq"]
    k = y @ p["wk"] + p["bk"]
    v = y @ p["wv"] + p["bv"]
    qh = q.reshape(B, S, H, DK).transpose(0, 2, 1, 3)
    kh = k.reshape(B, S, H, DK).transpose(0, 2, 1, 3)
    vh = v.reshape(B, S, H, DK).transpose(0, 2, 1, 3)
    scores = jnp.einsum("bhqd,bhkd->bhqk", qh, kh) / math.sqrt(DK)
    m = mask[:, None, :, :]                       # (B,1,1,S)
    scores = jnp.where(m == 0, -1e9, scores)
    pattn = jax.nn.softmax(scores, axis=-1)
    att = jnp.einsum("bhqk,bhkd->bhqd", pattn, vh).transpose(0, 2, 1, 3).reshape(B, S, D)
    att = att @ p["wo"] + p["bo"]
    x = x + att
    y2 = ln(x, p["ln2_a"], p["ln2_b"])
    ff = jnp.maximum(y2 @ p["w1"] + p["b1"], 0.0) @ p["w2"] + p["b2"]
    return x + ff


# ------------------------------------- main -------------------------------------------
if __name__ == "__main__":
    key = jax.random.PRNGKey(0)
    ks = jax.random.split(key, 12)

    params = {
        "ln1_a": jnp.ones((1, D), jnp.float32),
        "ln1_b": jnp.zeros((1, D), jnp.float32),
        "wq": 0.02 * jax.random.normal(ks[0], (D, D), jnp.float32),
        "bq": jnp.zeros((1, D), jnp.float32),
        "wk": 0.02 * jax.random.normal(ks[1], (D, D), jnp.float32),
        "bk": jnp.zeros((1, D), jnp.float32),
        "wv": 0.02 * jax.random.normal(ks[2], (D, D), jnp.float32),
        "bv": jnp.zeros((1, D), jnp.float32),
        "wo": 0.02 * jax.random.normal(ks[3], (D, D), jnp.float32),
        "bo": jnp.zeros((1, D), jnp.float32),
        "ln2_a": jnp.ones((1, D), jnp.float32),
        "ln2_b": jnp.zeros((1, D), jnp.float32),
        "w1": 0.02 * jax.random.normal(ks[4], (D, DFF), jnp.float32),
        "b1": 0.01 * jax.random.normal(ks[5], (1, DFF), jnp.float32),
        "w2": 0.02 * jax.random.normal(ks[6], (DFF, D), jnp.float32),
        "b2": 0.01 * jax.random.normal(ks[7], (1, D), jnp.float32),
    }

    x = jax.random.normal(ks[8], (B, S, D), jnp.float32)
    # mask: (B, 1, S); batch 1 has its last position masked out
    mask = jnp.ones((B, 1, S), jnp.int32)
    mask = mask.at[1, 0, S - 1].set(0)

    out = encoder_layer(x, mask, params)
    out = jax.block_until_ready(out)

    ref = encoder_layer_ref(x, mask, params)
    assert out.shape == (B, S, D)
    assert jnp.allclose(out, ref, atol=1e-4, rtol=1e-4), (
        f"max err {jnp.max(jnp.abs(out - ref))}")

    print("KERNEL_OK")
</pallas_src>

<mosaic_0001>
module attributes {stable_mosaic.version = 11 : i64} {
  func.func @encoder_layer_kernel(%arg0: memref<16x32xf32, #tpu.memory_space<vmem>>, %arg1: memref<96x128xf32, #tpu.memory_space<vmem>>, %arg2: memref<24x128xf32, #tpu.memory_space<vmem>>, %arg3: memref<16x32xf32, #tpu.memory_space<vmem>>) attributes {dimension_semantics = [], scalar_prefetch = 0 : i64, scratch_operands = 0 : i64, tpu.core_type = #tpu.core_type<tc>} {
    %c0 = arith.constant 0 : index
    %c0_0 = arith.constant 0 : index
    %0 = vector.load %arg0[%c0, %c0_0] : memref<16x32xf32, #tpu.memory_space<vmem>>, vector<16x32xf32>
    %c0_1 = arith.constant 0 : index
    %c0_2 = arith.constant 0 : index
    %1 = vector.load %arg1[%c0_1, %c0_2] : memref<96x128xf32, #tpu.memory_space<vmem>>, vector<32x96xf32>
    %c0_3 = arith.constant 0 : index
    %c96 = arith.constant 96 : index
    %2 = vector.load %arg1[%c0_3, %c96] : memref<96x128xf32, #tpu.memory_space<vmem>>, vector<32x32xf32>
    %c32 = arith.constant 32 : index
    %c0_4 = arith.constant 0 : index
    %3 = vector.load %arg1[%c32, %c0_4] : memref<96x128xf32, #tpu.memory_space<vmem>>, vector<32x64xf32>
    %c32_5 = arith.constant 32 : index
    %c64 = arith.constant 64 : index
    %4 = vector.load %arg1[%c32_5, %c64] : memref<96x128xf32, #tpu.memory_space<vmem>>, vector<64x32xf32>
    %c0_6 = arith.constant 0 : index
    %c0_7 = arith.constant 0 : index
    %5 = vector.load %arg2[%c0_6, %c0_7] : memref<24x128xf32, #tpu.memory_space<vmem>>, vector<1x32xf32>
    %c0_8 = arith.constant 0 : index
    %c32_9 = arith.constant 32 : index
    %6 = vector.load %arg2[%c0_8, %c32_9] : memref<24x128xf32, #tpu.memory_space<vmem>>, vector<1x32xf32>
    %c0_10 = arith.constant 0 : index
    %c64_11 = arith.constant 64 : index
    %7 = vector.load %arg2[%c0_10, %c64_11] : memref<24x128xf32, #tpu.memory_space<vmem>>, vector<1x32xf32>
    %c0_12 = arith.constant 0 : index
    %c96_13 = arith.constant 96 : index
    %8 = vector.load %arg2[%c0_12, %c96_13] : memref<24x128xf32, #tpu.memory_space<vmem>>, vector<1x32xf32>
    %c1 = arith.constant 1 : index
    %c0_14 = arith.constant 0 : index
    %9 = vector.load %arg2[%c1, %c0_14] : memref<24x128xf32, #tpu.memory_space<vmem>>, vector<1x96xf32>
    %c1_15 = arith.constant 1 : index
    %c96_16 = arith.constant 96 : index
    %10 = vector.load %arg2[%c1_15, %c96_16] : memref<24x128xf32, #tpu.memory_space<vmem>>, vector<1x32xf32>
    %c2 = arith.constant 2 : index
    %c0_17 = arith.constant 0 : index
    %11 = vector.load %arg2[%c2, %c0_17] : memref<24x128xf32, #tpu.memory_space<vmem>>, vector<1x64xf32>
    %c2_18 = arith.constant 2 : index
    %c64_19 = arith.constant 64 : index
    %12 = vector.load %arg2[%c2_18, %c64_19] : memref<24x128xf32, #tpu.memory_space<vmem>>, vector<1x32xf32>
    %c8 = arith.constant 8 : index
    %c0_20 = arith.constant 0 : index
    %13 = vector.load %arg2[%c8, %c0_20] : memref<24x128xf32, #tpu.memory_space<vmem>>, vector<16x16xf32>
    %cst = arith.constant dense<0.000000e+00> : vector<16xf32>
    %14 = vector.multi_reduction <add>, %0, %cst [1] : vector<16x32xf32> to vector<16xf32>
    %15 = vector.shape_cast %14 : vector<16xf32> to vector<16x1xf32>
    %cst_21 = arith.constant 3.200000e+01 : f32
    %16 = vector.broadcast %cst_21 : f32 to vector<16x1xf32>
    %17 = arith.divf %15, %16 : vector<16x1xf32>
    %18 = vector.broadcast %17 : vector<16x1xf32> to vector<16x32xf32>
    %19 = arith.subf %0, %18 : vector<16x32xf32>
    %20 = arith.mulf %19, %19 : vector<16x32xf32>
    %cst_22 = arith.constant dense<0.000000e+00> : vector<16xf32>
    %21 = vector.multi_reduction <add>, %20, %cst_22 [1] : vector<16x32xf32> to vector<16xf32>
    %22 = vector.shape_cast %21 : vector<16xf32> to vector<16x1xf32>
    %cst_23 = arith.constant 3.100000e+01 : f32
    %23 = vector.broadcast %cst_23 : f32 to vector<16x1xf32>
    %24 = arith.divf %22, %23 : vector<16x1xf32>
    %25 = math.sqrt %24 : vector<16x1xf32>
    %26 = vector.broadcast %17 : vector<16x1xf32> to vector<16x32xf32>
    %27 = arith.subf %0, %26 : vector<16x32xf32>
    %28 = vector.broadcast %5 : vector<1x32xf32> to vector<16x32xf32>
    %29 = arith.mulf %28, %27 : vector<16x32xf32>
    %cst_24 = arith.constant 9.99999997E-7 : f32
    %30 = vector.broadcast %cst_24 : f32 to vector<16x1xf32>
    %31 = arith.addf %25, %30 : vector<16x1xf32>
    %32 = tpu.reciprocal %31 : vector<16x1xf32> -> vector<16x1xf32>
    %33 = vector.broadcast %32 : vector<16x1xf32> to vector<16x32xf32>
    %34 = arith.mulf %29, %33 : vector<16x32xf32>
    %35 = vector.broadcast %6 : vector<1x32xf32> to vector<16x32xf32>
    %36 = arith.addf %34, %35 : vector<16x32xf32>
    %cst_25 = arith.constant dense<0.000000e+00> : vector<16x96xf32>
    %37 = tpu.matmul %36, %1, %cst_25 {dimension_numbers = #tpu.dot_dimension_numbers<[1], [0], [0], [1], [0, 0, 1, 1], [], []>} : vector<16x32xf32>, vector<32x96xf32>, vector<16x96xf32> -> vector<16x96xf32>
    %38 = vector.broadcast %9 : vector<1x96xf32> to vector<16x96xf32>
    %39 = arith.addf %37, %38 : vector<16x96xf32>
    %40 = vector.extract_strided_slice %39 {offsets = [0, 0], sizes = [16, 8], strides = [1, 1]} : vector<16x96xf32> to vector<16x8xf32>
    %41 = vector.extract_strided_slice %39 {offsets = [0, 32], sizes = [16, 8], strides = [1, 1]} : vector<16x96xf32> to vector<16x8xf32>
    %42 = vector.extract_strided_slice %39 {offsets = [0, 64], sizes = [16, 8], strides = [1, 1]} : vector<16x96xf32> to vector<16x8xf32>
    %cst_26 = arith.constant dense<0.000000e+00> : vector<16x16xf32>
    %43 = tpu.matmul %40, %41, %cst_26 {dimension_numbers = #tpu.dot_dimension_numbers<[1], [1], [0], [0], [0, 0, 1, 0], [], []>} : vector<16x8xf32>, vector<16x8xf32>, vector<16x16xf32> -> vector<16x16xf32>
    %44 = arith.addf %43, %13 : vector<16x16xf32>
    %cst_27 = arith.constant dense<0xFF800000> : vector<16xf32>
    %45 = vector.multi_reduction <maximumf>, %44, %cst_27 [1] : vector<16x16xf32> to vector<16xf32>
    %46 = vector.shape_cast %45 : vector<16xf32> to vector<16x1xf32>
    %47 = vector.broadcast %46 : vector<16x1xf32> to vector<16x16xf32>
    %48 = arith.subf %44, %47 : vector<16x16xf32>
    %49 = math.exp %48 : vector<16x16xf32>
    %cst_28 = arith.constant dense<0.000000e+00> : vector<16xf32>
    %50 = vector.multi_reduction <add>, %49, %cst_28 [1] : vector<16x16xf32> to vector<16xf32>
    %51 = vector.shape_cast %50 : vector<16xf32> to vector<16x1xf32>
    %52 = tpu.reciprocal %51 {approx = true} : vector<16x1xf32> -> vector<16x1xf32>
    %53 = vector.broadcast %52 : vector<16x1xf32> to vector<16x16xf32>
    %54 = arith.mulf %49, %53 : vector<16x16xf32>
    %cst_29 = arith.constant dense<0.000000e+00> : vector<16x8xf32>
    %55 = tpu.matmul %54, %42, %cst_29 {dimension_numbers = #tpu.dot_dimension_numbers<[1], [0], [0], [1], [0, 0, 1, 1], [], []>} : vector<16x16xf32>, vector<16x8xf32>, vector<16x8xf32> -> vector<16x8xf32>
    %56 = vector.extract_strided_slice %39 {offsets = [0, 8], sizes = [16, 8], strides = [1, 1]} : vector<16x96xf32> to vector<16x8xf32>
    %57 = vector.extract_strided_slice %39 {offsets = [0, 40], sizes = [16, 8], strides = [1, 1]} : vector<16x96xf32> to vector<16x8xf32>
    %58 = vector.extract_strided_slice %39 {offsets = [0, 72], sizes = [16, 8], strides = [1, 1]} : vector<16x96xf32> to vector<16x8xf32>
    %cst_30 = arith.constant dense<0.000000e+00> : vector<16x16xf32>
    %59 = tpu.matmul %56, %57, %cst_30 {dimension_numbers = #tpu.dot_dimension_numbers<[1], [1], [0], [0], [0, 0, 1, 0], [], []>} : vector<16x8xf32>, vector<16x8xf32>, vector<16x16xf32> -> vector<16x16xf32>
    %60 = arith.addf %59, %13 : vector<16x16xf32>
    %cst_31 = arith.constant dense<0xFF800000> : vector<16xf32>
    %61 = vector.multi_reduction <maximumf>, %60, %cst_31 [1] : vector<16x16xf32> to vector<16xf32>
    %62 = vector.shape_cast %61 : vector<16xf32> to vector<16x1xf32>
    %63 = vector.broadcast %62 : vector<16x1xf32> to vector<16x16xf32>
    %64 = arith.subf %60, %63 : vector<16x16xf32>
    %65 = math.exp %64 : vector<16x16xf32>
    %cst_32 = arith.constant dense<0.000000e+00> : vector<16xf32>
    %66 = vector.multi_reduction <add>, %65, %cst_32 [1] : vector<16x16xf32> to vector<16xf32>
    %67 = vector.shape_cast %66 : vector<16xf32> to vector<16x1xf32>
    %68 = tpu.reciprocal %67 {approx = true} : vector<16x1xf32> -> vector<16x1xf32>
    %69 = vector.broadcast %68 : vector<16x1xf32> to vector<16x16xf32>
    %70 = arith.mulf %65, %69 : vector<16x16xf32>
    %cst_33 = arith.constant dense<0.000000e+00> : vector<16x8xf32>
    %71 = tpu.matmul %70, %58, %cst_33 {dimension_numbers = #tpu.dot_dimension_numbers<[1], [0], [0], [1], [0, 0, 1, 1], [], []>} : vector<16x16xf32>, vector<16x8xf32>, vector<16x8xf32> -> vector<16x8xf32>
    %72 = vector.extract_strided_slice %39 {offsets = [0, 16], sizes = [16, 8], strides = [1, 1]} : vector<16x96xf32> to vector<16x8xf32>
    %73 = vector.extract_strided_slice %39 {offsets = [0, 48], sizes = [16, 8], strides = [1, 1]} : vector<16x96xf32> to vector<16x8xf32>
    %74 = vector.extract_strided_slice %39 {offsets = [0, 80], sizes = [16, 8], strides = [1, 1]} : vector<16x96xf32> to vector<16x8xf32>
    %cst_34 = arith.constant dense<0.000000e+00> : vector<16x16xf32>
    %75 = tpu.matmul %72, %73, %cst_34 {dimension_numbers = #tpu.dot_dimension_numbers<[1], [1], [0], [0], [0, 0, 1, 0], [], []>} : vector<16x8xf32>, vector<16x8xf32>, vector<16x16xf32> -> vector<16x16xf32>
    %76 = arith.addf %75, %13 : vector<16x16xf32>
    %cst_35 = arith.constant dense<0xFF800000> : vector<16xf32>
    %77 = vector.multi_reduction <maximumf>, %76, %cst_35 [1] : vector<16x16xf32> to vector<16xf32>
    %78 = vector.shape_cast %77 : vector<16xf32> to vector<16x1xf32>
    %79 = vector.broadcast %78 : vector<16x1xf32> to vector<16x16xf32>
    %80 = arith.subf %76, %79 : vector<16x16xf32>
    %81 = math.exp %80 : vector<16x16xf32>
    %cst_36 = arith.constant dense<0.000000e+00> : vector<16xf32>
    %82 = vector.multi_reduction <add>, %81, %cst_36 [1] : vector<16x16xf32> to vector<16xf32>
    %83 = vector.shape_cast %82 : vector<16xf32> to vector<16x1xf32>
    %84 = tpu.reciprocal %83 {approx = true} : vector<16x1xf32> -> vector<16x1xf32>
    %85 = vector.broadcast %84 : vector<16x1xf32> to vector<16x16xf32>
    %86 = arith.mulf %81, %85 : vector<16x16xf32>
    %cst_37 = arith.constant dense<0.000000e+00> : vector<16x8xf32>
    %87 = tpu.matmul %86, %74, %cst_37 {dimension_numbers = #tpu.dot_dimension_numbers<[1], [0], [0], [1], [0, 0, 1, 1], [], []>} : vector<16x16xf32>, vector<16x8xf32>, vector<16x8xf32> -> vector<16x8xf32>
    %88 = vector.extract_strided_slice %39 {offsets = [0, 24], sizes = [16, 8], strides = [1, 1]} : vector<16x96xf32> to vector<16x8xf32>
    %89 = vector.extract_strided_slice %39 {offsets = [0, 56], sizes = [16, 8], strides = [1, 1]} : vector<16x96xf32> to vector<16x8xf32>
    %90 = vector.extract_strided_slice %39 {offsets = [0, 88], sizes = [16, 8], strides = [1, 1]} : vector<16x96xf32> to vector<16x8xf32>
    %cst_38 = arith.constant dense<0.000000e+00> : vector<16x16xf32>
    %91 = tpu.matmul %88, %89, %cst_38 {dimension_numbers = #tpu.dot_dimension_numbers<[1], [1], [0], [0], [0, 0, 1, 0], [], []>} : vector<16x8xf32>, vector<16x8xf32>, vector<16x16xf32> -> vector<16x16xf32>
    %92 = arith.addf %91, %13 : vector<16x16xf32>
    %cst_39 = arith.constant dense<0xFF800000> : vector<16xf32>
    %93 = vector.multi_reduction <maximumf>, %92, %cst_39 [1] : vector<16x16xf32> to vector<16xf32>
    %94 = vector.shape_cast %93 : vector<16xf32> to vector<16x1xf32>
    %95 = vector.broadcast %94 : vector<16x1xf32> to vector<16x16xf32>
    %96 = arith.subf %92, %95 : vector<16x16xf32>
    %97 = math.exp %96 : vector<16x16xf32>
    %cst_40 = arith.constant dense<0.000000e+00> : vector<16xf32>
    %98 = vector.multi_reduction <add>, %97, %cst_40 [1] : vector<16x16xf32> to vector<16xf32>
    %99 = vector.shape_cast %98 : vector<16xf32> to vector<16x1xf32>
    %100 = tpu.reciprocal %99 {approx = true} : vector<16x1xf32> -> vector<16x1xf32>
    %101 = vector.broadcast %100 : vector<16x1xf32> to vector<16x16xf32>
    %102 = arith.mulf %97, %101 : vector<16x16xf32>
    %cst_41 = arith.constant dense<0.000000e+00> : vector<16x8xf32>
    %103 = tpu.matmul %102, %90, %cst_41 {dimension_numbers = #tpu.dot_dimension_numbers<[1], [0], [0], [1], [0, 0, 1, 1], [], []>} : vector<16x16xf32>, vector<16x8xf32>, vector<16x8xf32> -> vector<16x8xf32>
    %104 = tpu.concatenate %55, %71, %87, %103 in 1 : vector<16x8xf32>, vector<16x8xf32>, vector<16x8xf32>, vector<16x8xf32> -> vector<16x32xf32>
    %cst_42 = arith.constant dense<0.000000e+00> : vector<16x32xf32>
    %105 = tpu.matmul %104, %2, %cst_42 {dimension_numbers = #tpu.dot_dimension_numbers<[1], [0], [0], [1], [0, 0, 1, 1], [], []>} : vector<16x32xf32>, vector<32x32xf32>, vector<16x32xf32> -> vector<16x32xf32>
    %106 = vector.broadcast %10 : vector<1x32xf32> to vector<16x32xf32>
    %107 = arith.addf %105, %106 : vector<16x32xf32>
    %108 = arith.addf %0, %107 : vector<16x32xf32>
    %cst_43 = arith.constant dense<0.000000e+00> : vector<16xf32>
    %109 = vector.multi_reduction <add>, %108, %cst_43 [1] : vector<16x32xf32> to vector<16xf32>
    %110 = vector.shape_cast %109 : vector<16xf32> to vector<16x1xf32>
    %cst_44 = arith.constant 3.200000e+01 : f32
    %111 = vector.broadcast %cst_44 : f32 to vector<16x1xf32>
    %112 = arith.divf %110, %111 : vector<16x1xf32>
    %113 = vector.broadcast %112 : vector<16x1xf32> to vector<16x32xf32>
    %114 = arith.subf %108, %113 : vector<16x32xf32>
    %115 = arith.mulf %114, %114 : vector<16x32xf32>
    %cst_45 = arith.constant dense<0.000000e+00> : vector<16xf32>
    %116 = vector.multi_reduction <add>, %115, %cst_45 [1] : vector<16x32xf32> to vector<16xf32>
    %117 = vector.shape_cast %116 : vector<16xf32> to vector<16x1xf32>
    %cst_46 = arith.constant 3.100000e+01 : f32
    %118 = vector.broadcast %cst_46 : f32 to vector<16x1xf32>
    %119 = arith.divf %117, %118 : vector<16x1xf32>
    %120 = math.sqrt %119 : vector<16x1xf32>
    %121 = vector.broadcast %112 : vector<16x1xf32> to vector<16x32xf32>
    %122 = arith.subf %108, %121 : vector<16x32xf32>
    %123 = vector.broadcast %7 : vector<1x32xf32> to vector<16x32xf32>
    %124 = arith.mulf %123, %122 : vector<16x32xf32>
    %cst_47 = arith.constant 9.99999997E-7 : f32
    %125 = vector.broadcast %cst_47 : f32 to vector<16x1xf32>
    %126 = arith.addf %120, %125 : vector<16x1xf32>
    %127 = tpu.reciprocal %126 : vector<16x1xf32> -> vector<16x1xf32>
    %128 = vector.broadcast %127 : vector<16x1xf32> to vector<16x32xf32>
    %129 = arith.mulf %124, %128 : vector<16x32xf32>
    %130 = vector.broadcast %8 : vector<1x32xf32> to vector<16x32xf32>
    %131 = arith.addf %129, %130 : vector<16x32xf32>
    %cst_48 = arith.constant dense<0.000000e+00> : vector<16x64xf32>
    %132 = tpu.matmul %131, %3, %cst_48 {dimension_numbers = #tpu.dot_dimension_numbers<[1], [0], [0], [1], [0, 0, 1, 1], [], []>} : vector<16x32xf32>, vector<32x64xf32>, vector<16x64xf32> -> vector<16x64xf32>
    %133 = vector.broadcast %11 : vector<1x64xf32> to vector<16x64xf32>
    %134 = arith.addf %132, %133 : vector<16x64xf32>
    %cst_49 = arith.constant 0.000000e+00 : f32
    %135 = vector.broadcast %cst_49 : f32 to vector<16x64xf32>
    %136 = arith.maximumf %134, %135 : vector<16x64xf32>
    %cst_50 = arith.constant dense<0.000000e+00> : vector<16x32xf32>
    %137 = tpu.matmul %136, %4, %cst_50 {dimension_numbers = #tpu.dot_dimension_numbers<[1], [0], [0], [1], [0, 0, 1, 1], [], []>} : vector<16x64xf32>, vector<64x32xf32>, vector<16x32xf32> -> vector<16x32xf32>
    %138 = vector.broadcast %12 : vector<1x32xf32> to vector<16x32xf32>
    %139 = arith.addf %137, %138 : vector<16x32xf32>
    %140 = arith.addf %108, %139 : vector<16x32xf32>
    %c0_51 = arith.constant 0 : index
    %c0_52 = arith.constant 0 : index
    %141 = vector.load %arg3[%c0_51, %c0_52] : memref<16x32xf32, #tpu.memory_space<vmem>>, vector<16x32xf32>
    tpu.vector_store %arg3[%c0_51, %c0_52], %140 {strides = array<i32>} : memref<16x32xf32, #tpu.memory_space<vmem>>, vector<16x32xf32>,
    return
  }
}

</mosaic_0001>

<llo_original>
// kernel: tpu_custom_call.1
$region0: #{tpu_custom_call.1}
  #allocation0 [shape = 'u32[]', space=smem, size = 0x4, offset = 0x4, fixed_abs, tag = 'smem constant byte address 0x4 - core index']
  #allocation1 [shape = 'u32[144,128]{1,0:T(1,128)}', space=vmem, size = 0x12000, scoped, tag = 'internal scratch']
  %s0 = inlined_call_operand.hbm [shape: f32[16,32], index: 0, kind: input, shape index: {}]
  %s1 = inlined_call_operand.hbm [shape: f32[96,128], index: 1, kind: input, shape index: {}]
  %s2 = inlined_call_operand.hbm [shape: f32[24,128], index: 2, kind: input, shape index: {}]
  %s3 = inlined_call_operand.hbm [shape: f32[16,32], index: 3, kind: output, shape index: {}]
  %s4 = sld [smem:[#allocation0]]
  $region34: #{tpu_custom_call.1} parent=0
    _
  %s6 = ssub.s32 1, %s4
  %s7 = scalar_select 0, %s6, %s4
  $region1: #{tpu_custom_call.1} parent=0
    #allocation2 [shape = 'u8[8192]{0}', space=vmem, size = 0x2000, scoped, tag = 'input window, operand 0, single buffered']
    #allocation3 [shape = 's32[1]{0}', space=sflag, size = 0x4, scoped, tag = 'scoped memory for tpu_custom_call.1']
    #allocation4 [shape = 's32[1]{0}', space=sflag, size = 0x4, scoped, tag = 'scoped memory for tpu_custom_call.1']
    #allocation5 [shape = 'u8[49152]{0}', space=vmem, size = 0xc000, scoped, tag = 'input window, operand 1, single buffered']
    #allocation6 [shape = 's32[1]{0}', space=sflag, size = 0x4, scoped, tag = 'scoped memory for tpu_custom_call.1']
    #allocation7 [shape = 'u8[12288]{0}', space=vmem, size = 0x3000, scoped, tag = 'input window, operand 2, single buffered']
    #allocation8 [shape = 'u8[8192]{0}', space=vmem, size = 0x2000, scoped, tag = 'output window, operand 0, single buffered']
    %8 = vsyncpa [#allocation3], 0
    %9 = vsyncpa [#allocation6], 0
    %10 = vsyncpa [#allocation4], 0
    // Predicated region
    $region2: #{tpu_custom_call.1} parent=1 // pred_check
      _
    $region3: #{tpu_custom_call.1} parent=1 // pred_check_branch
      %12 = sbr.rel (0) target = $region5
    $region4: #{tpu_custom_call.1} parent=1 // pred_region
      %s14 = ssub.s32 256, 256
      %15 = vsyncadd [#allocation3], %s14
      %s16 = sshll.u32 [#allocation2], 4
      %s17 = int_to_ptr.vmem [resolvable:$true] %s16
      %22 = dma.hbm_to_vmem [thread:$0]  %s0, 256, %s17, [#allocation3], 128, 128, 8
    $region5: #{tpu_custom_call.1} parent=1 // pred_fallthru
      _
    // Predicated region
    $region6: #{tpu_custom_call.1} parent=1 // pred_check
      _
    $region7: #{tpu_custom_call.1} parent=1 // pred_check_branch
      %24 = sbr.rel (0) target = $region9
    $region8: #{tpu_custom_call.1} parent=1 // pred_region
      %s26 = ssub.s32 1536, 1536
      %27 = vsyncadd [#allocation6], %s26
      %s28 = sshll.u32 [#allocation5], 4
      %s29 = int_to_ptr.vmem [resolvable:$true] %s28
      %34 = dma.hbm_to_vmem [thread:$0]  %s1, 1536, %s29, [#allocation6], 128, 128, 8
    $region9: #{tpu_custom_call.1} parent=1 // pred_fallthru
      _
    // Predicated region
    $region10: #{tpu_custom_call.1} parent=1 // pred_check
      _
    $region11: #{tpu_custom_call.1} parent=1 // pred_check_branch
      %36 = sbr.rel (0) target = $region13
    $region12: #{tpu_custom_call.1} parent=1 // pred_region
      %s38 = ssub.s32 384, 384
      %39 = vsyncadd [#allocation6], %s38
      %s40 = sshll.u32 [#allocation7], 4
      %s41 = int_to_ptr.vmem [resolvable:$true] %s40
      %46 = dma.hbm_to_vmem [thread:$0]  %s2, 384, %s41, [#allocation6], 128, 128, 8
    $region13: #{tpu_custom_call.1} parent=1 // pred_fallthru
      _
    // Predicated region
    $region14: #{tpu_custom_call.1} parent=1 // pred_check
      _
    $region15: #{tpu_custom_call.1} parent=1 // pred_check_branch
      %48 = sbr.rel (0) target = $region17
    $region16: #{tpu_custom_call.1} parent=1 // pred_region
      %49 = dma.done [#allocation3], 256
    $region17: #{tpu_custom_call.1} parent=1 // pred_fallthru
      _
    // Predicated region
    $region18: #{tpu_custom_call.1} parent=1 // pred_check
      _
    $region19: #{tpu_custom_call.1} parent=1 // pred_check_branch
      %51 = sbr.rel (0) target = $region21
    $region20: #{tpu_custom_call.1} parent=1 // pred_region
      %52 = dma.done [#allocation6], 1536
    $region21: #{tpu_custom_call.1} parent=1 // pred_fallthru
      _
    // Predicated region
    $region22: #{tpu_custom_call.1} parent=1 // pred_check
      _
    $region23: #{tpu_custom_call.1} parent=1 // pred_check_branch
      %54 = sbr.rel (0) target = $region25
    $region24: #{tpu_custom_call.1} parent=1 // pred_region
      %55 = dma.done [#allocation6], 384
    $region25: #{tpu_custom_call.1} parent=1 // pred_fallthru
      _
    %v56 = vld [vmem:[#allocation2] sm:$0xff]
    %v57 = vld [vmem:[#allocation2 + $0x8] sm:$0xff]
    %v58 = vld [vmem:[#allocation5] sm:$0xff]
    %v59 = vld [vmem:[#allocation5 + $0x8] sm:$0xff]
    %v60 = vld [vmem:[#allocation5 + $0x10] sm:$0xff]
    %v61 = vld [vmem:[#allocation5 + $0x18] sm:$0xff]
    %v62 = vld [vmem:[#allocation5 + $0x20] sm:$0xff]
    %v63 = vld [vmem:[#allocation5 + $0x28] sm:$0xff]
    %v64 = vld [vmem:[#allocation5 + $0x30] sm:$0xff]
    %v65 = vld [vmem:[#allocation5 + $0x38] sm:$0xff]
    %v66 = vld [vmem:[#allocation5 + $0x20] sm:$0xff]
    %v67 = vld [vmem:[#allocation5 + $0x28] sm:$0xff]
    %v68 = vld [vmem:[#allocation5 + $0x30] sm:$0xff]
    %v69 = vld [vmem:[#allocation5 + $0x38] sm:$0xff]
    %v70 = vld [vmem:[#allocation5 + $0x40] sm:$0xff]
    %v71 = vld [vmem:[#allocation5 + $0x48] sm:$0xff]
    %v72 = vld [vmem:[#allocation5 + $0x50] sm:$0xff]
    %v73 = vld [vmem:[#allocation5 + $0x58] sm:$0xff]
    %v74 = vld [vmem:[#allocation7] sm:$0x1]
    %v75 = vld [vmem:[#allocation7 + $0x1] sm:$0x1]
    %v76 = vld [vmem:[#allocation7 + $0x2] sm:$0x1]
    %v77 = vld [vmem:[#allocation7 + $0x8] sm:$0xff]
    %v78 = vld [vmem:[#allocation7 + $0x10] sm:$0xff]
    %vm79 = vcmask 261120
    %v80 = vsel %vm79, %v56, 0.0
    %81 = vadd.xlane.f32.xlu0 %v80
    %v82 = vpop.xlane.xlu0 %81
    %v83 = vsel %vm79, %v57, 0.0
    %84 = vadd.xlane.f32.xlu0 %v83
    %v85 = vpop.xlane.xlu0 %84
    %v86 = vrcp.pop 32.0
    %v87 = vmul.f32 %v82, %v86
    %v88 = vmul.f32 %v85, %v86
    %v89 = vsub.f32 %v56, %v87
    %v90 = vsub.f32 %v57, %v88
    %v91 = vmul.f32 %v89, %v89
    %v92 = vmul.f32 %v90, %v90
    %v93 = vsel %vm79, %v91, 0.0
    %94 = vadd.xlane.f32.xlu0 %v93
    %v95 = vpop.xlane.xlu0 %94
    %v96 = vsel %vm79, %v92, 0.0
    %97 = vadd.xlane.f32.xlu0 %v96
    %v98 = vpop.xlane.xlu0 %97
    %v99 = vrcp.pop 31.0
    %v100 = vmul.f32 %v95, %v99
    %v101 = vmul.f32 %v98, %v99
    %v102 = vrsqrt.pop %v100
    %v103 = vmul.f32 %v100, %v102
    %vm104 = vcmp.eq.f32.partialorder %v100, inf
    %v105 = vsel %vm104, %v100, %v103
    %vm106 = vcmp.eq.f32.partialorder %v100, 0.0
    %v107 = vand.u32 %v100, 2147483648
    %v108 = vsel %vm106, %v107, %v105
    %v109 = vrsqrt.pop %v101
    %v110 = vmul.f32 %v101, %v109
    %vm111 = vcmp.eq.f32.partialorder %v101, inf
    %v112 = vsel %vm111, %v101, %v110
    %vm113 = vcmp.eq.f32.partialorder %v101, 0.0
    %v114 = vand.u32 %v101, 2147483648
    %v115 = vsel %vm113, %v114, %v112
    %v116 = vlaneseq
    %v117 = vshrl.u32 %v116, 7
    %v118 = vsub.s32 0, %v117
    %v119 = vrot.slane %v74, %v118
    %v120 = vmul.f32 %v119, %v89
    %v121 = vmul.f32 %v119, %v90
    %v122 = vadd.f32 %v108, 1e-06
    %v123 = vadd.f32 %v115, 1e-06
    %v124 = vrcp.pop %v122
    %v125 = vrcp.pop %v123
    %v126 = vmul.f32 %v120, %v124
    %v127 = vmul.f32 %v121, %v125
    %129 = vrot.lane.b32.xlu0 %v119, 96
    %v130 = vpop.permute.xlu0 %129
    %v132 = vadd.f32 %v126, %v130
    %v133 = vadd.f32 %v127, %v130
    %v134 = vlaneseq
    %v135 = vshrl.u32 %v134, 7
    %v136 = vsub.s32 0, %v135
    %v137 = vrot.slane %v75, %v136
    %v139 = vsel %vm79, %v132, 0
    %v142 = vsel %vm79, %v133, 0
    %144 = vmatprep.subr.mxu0 0.0
    %145 = vmatpush1.msra.mxu0 %v58
    %146 = vmatprep.subr.mxu0 0.0
    %147 = vmatpush1.msra.mxu0 %v59
    %148 = vmatprep.subr.mxu0 0.0
    %149 = vmatpush1.msra.mxu0 %v60
    %150 = vmatprep.subr.mxu0 0.0
    %151 = vmatpush1.msra.mxu0 %v61
    %152 = vmatprep.subr.mxu0 0.0
    %153 = vmatpush1.msra.mxu0 0.0
    %154 = vmatprep.subr.mxu0 0.0
    %155 = vmatpush1.msra.mxu0 0.0
    %156 = vmatprep.subr.mxu0 0.0
    %157 = vmatpush1.msra.mxu0 0.0
    %158 = vmatprep.subr.mxu0 0.0
    %159 = vmatpush1.msra.mxu0 0.0
    %160 = vmatprep.subr.mxu0 0.0
    %161 = vmatpush1.msra.mxu0 0.0
    %162 = vmatprep.subr.mxu0 0.0
    %163 = vmatpush1.msra.mxu0 0.0
    %164 = vmatprep.subr.mxu0 0.0
    %165 = vmatpush1.msra.mxu0 0.0
    %166 = vmatprep.subr.mxu0 0.0
    %167 = vmatpush1.msra.mxu0 0.0
    %168 = vmatprep.subr.mxu0 0.0
    %169 = vmatpush1.msra.mxu0 0.0
    %170 = vmatprep.subr.mxu0 0.0
    %171 = vmatpush1.msra.mxu0 0.0
    %172 = vmatprep.subr.mxu0 0.0
    %173 = vmatpush1.msra.mxu0 0.0
    %174 = vmatprep.subr.mxu0 0.0
    %175 = vmatpush1.msra.mxu0 0.0
    %176 = vmatprep.subr.mxu0 0.0
    %177 = vmatpush1.msra.mxu0 0.0
    %178 = vmatprep.subr.mxu0 0.0
    %179 = vmatpush1.msra.mxu0 0.0
    %180 = vmatprep.subr.mxu0 0.0
    %181 = vmatpush1.msra.mxu0 0.0
    %182 = vmatprep.subr.mxu0 0.0
    %183 = vmatpush1.msra.mxu0 0.0
    %184 = vmatprep.subr.mxu0 0.0
    %185 = vmatpush1.msra.mxu0 0.0
    %186 = vmatprep.subr.mxu0 0.0
    %187 = vmatpush1.msra.mxu0 0.0
    %188 = vmatprep.subr.mxu0 0.0
    %189 = vmatpush1.msra.mxu0 0.0
    %190 = vmatprep.subr.mxu0 0.0
    %191 = vmatpush1.msra.mxu0 0.0
    %192 = vmatprep.subr.mxu0 0.0
    %193 = vmatpush1.msra.mxu0 0.0
    %194 = vmatprep.subr.mxu0 0.0
    %195 = vmatpush1.msra.mxu0 0.0
    %196 = vmatprep.subr.mxu0 0.0
    %197 = vmatpush1.msra.mxu0 0.0
    %198 = vmatprep.subr.mxu0 0.0
    %199 = vmatpush1.msra.mxu0 0.0
    %200 = vmatprep.subr.mxu0 0.0
    %201 = vmatpush1.msra.mxu0 0.0
    %202 = vmatprep.subr.mxu0 0.0
    %203 = vmatpush1.msra.mxu0 0.0
    %204 = vmatprep.subr.mxu0 0.0
    %205 = vmatpush1.msra.mxu0 0.0
    %206 = vmatprep.subr.mxu0 0.0
    %207 = vmatpush1.msra.mxu0 0.0
    %208 = vmatprep.mubr.f32.mxu0 0.0
    %209 = vmatmul.mubr.f32.gmra.mrb[0].mxu0 %v139
    %v210 = vpop.f32.mrb[0].mxu0
    %v211 = vadd.f32 %v137, %v210
    %v212 = vpop.f32.mrb[0].mxu0
    %213 = vmatprep.mubr.f32.mxu0 0.0
    %214 = vmatmul.mubr.f32.gmra.mrb[0].mxu0 %v142
    %v215 = vpop.f32.mrb[0].mxu0
    %v216 = vadd.f32 %v137, %v215
    %v217 = vpop.f32.mrb[0].mxu0
    %218 = vdwg.mxu0
    %221 = vrot.lane.b32.xlu0 %v211, 96
    %v222 = vpop.permute.xlu0 %221
    %223 = vrot.lane.b32.xlu0 %v216, 96
    %v224 = vpop.permute.xlu0 %223
    %vm225 = vcmask 64512
    %v226 = vsel %vm225, %v211, 0
    %v228 = vsel %vm225, %v216, 0
    %v230 = vsel %vm225, %v222, 0
    %v232 = vsel %vm225, %v224, 0
    %234 = vmatprep.subr.mxu0 0.0
    %235 = vmatpush1.xpose.msra.mxu0 %v230
    %236 = vmatprep.subr.mxu0 0.0
    %237 = vmatpush1.xpose.msra.mxu0 %v232
    %238 = vmatprep.subr.mxu0 0.0
    %239 = vmatpush1.xpose.msra.mxu0 0.0
    %240 = vmatprep.subr.mxu0 0.0
    %241 = vmatpush1.xpose.msra.mxu0 0.0
    %242 = vmatprep.subr.mxu0 0.0
    %243 = vmatpush1.xpose.msra.mxu0 0.0
    %244 = vmatprep.subr.mxu0 0.0
    %245 = vmatpush1.xpose.msra.mxu0 0.0
    %246 = vmatprep.subr.mxu0 0.0
    %247 = vmatpush1.xpose.msra.mxu0 0.0
    %248 = vmatprep.subr.mxu0 0.0
    %249 = vmatpush1.xpose.msra.mxu0 0.0
    %250 = vmatprep.subr.mxu0 0.0
    %251 = vmatpush1.xpose.msra.mxu0 0.0
    %252 = vmatprep.subr.mxu0 0.0
    %253 = vmatpush1.xpose.msra.mxu0 0.0
    %254 = vmatprep.subr.mxu0 0.0
    %255 = vmatpush1.xpose.msra.mxu0 0.0
    %256 = vmatprep.subr.mxu0 0.0
    %257 = vmatpush1.xpose.msra.mxu0 0.0
    %258 = vmatprep.subr.mxu0 0.0
    %259 = vmatpush1.xpose.msra.mxu0 0.0
    %260 = vmatprep.subr.mxu0 0.0
    %261 = vmatpush1.xpose.msra.mxu0 0.0
    %262 = vmatprep.subr.mxu0 0.0
    %263 = vmatpush1.xpose.msra.mxu0 0.0
    %264 = vmatprep.subr.mxu0 0.0
    %265 = vmatpush1.xpose.msra.mxu0 0.0
    %266 = vmatprep.subr.mxu0 0.0
    %267 = vmatpush1.xpose.msra.mxu0 0.0
    %268 = vmatprep.subr.mxu0 0.0
    %269 = vmatpush1.xpose.msra.mxu0 0.0
    %270 = vmatprep.subr.mxu0 0.0
    %271 = vmatpush1.xpose.msra.mxu0 0.0
    %272 = vmatprep.subr.mxu0 0.0
    %273 = vmatpush1.xpose.msra.mxu0 0.0
    %274 = vmatprep.subr.mxu0 0.0
    %275 = vmatpush1.xpose.msra.mxu0 0.0
    %276 = vmatprep.subr.mxu0 0.0
    %277 = vmatpush1.xpose.msra.mxu0 0.0
    %278 = vmatprep.subr.mxu0 0.0
    %279 = vmatpush1.xpose.msra.mxu0 0.0
    %280 = vmatprep.subr.mxu0 0.0
    %281 = vmatpush1.xpose.msra.mxu0 0.0
    %282 = vmatprep.subr.mxu0 0.0
    %283 = vmatpush1.xpose.msra.mxu0 0.0
    %284 = vmatprep.subr.mxu0 0.0
    %285 = vmatpush1.xpose.msra.mxu0 0.0
    %286 = vmatprep.subr.mxu0 0.0
    %287 = vmatpush1.xpose.msra.mxu0 0.0
    %288 = vmatprep.subr.mxu0 0.0
    %289 = vmatpush1.xpose.msra.mxu0 0.0
    %290 = vmatprep.subr.mxu0 0.0
    %291 = vmatpush1.xpose.msra.mxu0 0.0
    %292 = vmatprep.subr.mxu0 0.0
    %293 = vmatpush1.xpose.msra.mxu0 0.0
    %294 = vmatprep.subr.mxu0 0.0
    %295 = vmatpush1.xpose.msra.mxu0 0.0
    %296 = vmatprep.subr.mxu0 0.0
    %297 = vmatpush1.xpose.msra.mxu0 0.0
    %298 = vmatprep.mubr.f32.mxu0 0.0
    %299 = vmatmul.mubr.f32.gmra.mrb[0].mxu0 %v226
    %v300 = vpop.f32.mrb[0].mxu0
    %v301 = vadd.f32 %v77, %v300
    %v302 = vpop.f32.mrb[0].mxu0
    %303 = vmatprep.mubr.f32.mxu0 0.0
    %304 = vmatmul.mubr.f32.gmra.mrb[0].mxu0 %v228
    %v305 = vpop.f32.mrb[0].mxu0
    %v306 = vadd.f32 %v78, %v305
    %v307 = vpop.f32.mrb[0].mxu0
    %308 = vdwg.mxu0
    %vm309 = vcmask 130048
    %v310 = vsel %vm309, %v301, -inf
    %311 = vmax.xlane.f32.xlu0 %v310
    %v312 = vpop.xlane.xlu0 %311
    %v313 = vsel %vm309, %v306, -inf
    %314 = vmax.xlane.f32.xlu0 %v313
    %v315 = vpop.xlane.xlu0 %314
    %v316 = vsub.f32 %v301, %v312
    %v317 = vsub.f32 %v306, %v315
    %v318 = vmul.f32 %v316, 1.442695
    %v319 = vpow.pop %v318
    %v320 = vmul.f32 %v317, 1.442695
    %v321 = vpow.pop %v320
    %v322 = vsel %vm309, %v319, 0.0
    %323 = vadd.xlane.f32.xlu0 %v322
    %v324 = vpop.xlane.xlu0 %323
    %v325 = vsel %vm309, %v321, 0.0
    %326 = vadd.xlane.f32.xlu0 %v325
    %v327 = vpop.xlane.xlu0 %326
    %v328 = vrcp.pop %v324
    %v329 = vrcp.pop %v327
    %v330 = vmul.f32 %v319, %v328
    %v331 = vmul.f32 %v321, %v329
    %332 = vrot.lane.b32.xlu0 %v211, 64
    %v333 = vpop.permute.xlu0 %332
    %334 = vrot.lane.b32.xlu0 %v216, 64
    %v335 = vpop.permute.xlu0 %334
    %v339 = vsel %vm309, %v330, 0
    %v342 = vsel %vm309, %v331, 0
    %344 = vmatprep.subr.mxu0 0.0
    %345 = vmatpush1.msra.mxu0 %v333
    %346 = vmatprep.subr.mxu0 0.0
    %347 = vmatpush1.msra.mxu0 %v335
    %348 = vmatprep.subr.mxu0 0.0
    %349 = vmatpush1.msra.mxu0 0.0
    %350 = vmatprep.subr.mxu0 0.0
    %351 = vmatpush1.msra.mxu0 0.0
    %352 = vmatprep.subr.mxu0 0.0
    %353 = vmatpush1.msra.mxu0 0.0
    %354 = vmatprep.subr.mxu0 0.0
    %355 = vmatpush1.msra.mxu0 0.0
    %356 = vmatprep.subr.mxu0 0.0
    %357 = vmatpush1.msra.mxu0 0.0
    %358 = vmatprep.subr.mxu0 0.0
    %359 = vmatpush1.msra.mxu0 0.0
    %360 = vmatprep.subr.mxu0 0.0
    %361 = vmatpush1.msra.mxu0 0.0
    %362 = vmatprep.subr.mxu0 0.0
    %363 = vmatpush1.msra.mxu0 0.0
    %364 = vmatprep.subr.mxu0 0.0
    %365 = vmatpush1.msra.mxu0 0.0
    %366 = vmatprep.subr.mxu0 0.0
    %367 = vmatpush1.msra.mxu0 0.0
    %368 = vmatprep.subr.mxu0 0.0
    %369 = vmatpush1.msra.mxu0 0.0
    %370 = vmatprep.subr.mxu0 0.0
    %371 = vmatpush1.msra.mxu0 0.0
    %372 = vmatprep.subr.mxu0 0.0
    %373 = vmatpush1.msra.mxu0 0.0
    %374 = vmatprep.subr.mxu0 0.0
    %375 = vmatpush1.msra.mxu0 0.0
    %376 = vmatprep.subr.mxu0 0.0
    %377 = vmatpush1.msra.mxu0 0.0
    %378 = vmatprep.subr.mxu0 0.0
    %379 = vmatpush1.msra.mxu0 0.0
    %380 = vmatprep.subr.mxu0 0.0
    %381 = vmatpush1.msra.mxu0 0.0
    %382 = vmatprep.subr.mxu0 0.0
    %383 = vmatpush1.msra.mxu0 0.0
    %384 = vmatprep.subr.mxu0 0.0
    %385 = vmatpush1.msra.mxu0 0.0
    %386 = vmatprep.subr.mxu0 0.0
    %387 = vmatpush1.msra.mxu0 0.0
    %388 = vmatprep.subr.mxu0 0.0
    %389 = vmatpush1.msra.mxu0 0.0
    %390 = vmatprep.subr.mxu0 0.0
    %391 = vmatpush1.msra.mxu0 0.0
    %392 = vmatprep.subr.mxu0 0.0
    %393 = vmatpush1.msra.mxu0 0.0
    %394 = vmatprep.subr.mxu0 0.0
    %395 = vmatpush1.msra.mxu0 0.0
    %396 = vmatprep.subr.mxu0 0.0
    %397 = vmatpush1.msra.mxu0 0.0
    %398 = vmatprep.subr.mxu0 0.0
    %399 = vmatpush1.msra.mxu0 0.0
    %400 = vmatprep.subr.mxu0 0.0
    %401 = vmatpush1.msra.mxu0 0.0
    %402 = vmatprep.subr.mxu0 0.0
    %403 = vmatpush1.msra.mxu0 0.0
    %404 = vmatprep.subr.mxu0 0.0
    %405 = vmatpush1.msra.mxu0 0.0
    %406 = vmatprep.subr.mxu0 0.0
    %407 = vmatpush1.msra.mxu0 0.0
    %408 = vmatprep.mubr.f32.mxu0 0.0
    %409 = vmatmul.mubr.f32.gmra.mrb[0].mxu0 %v339
    %v410 = vpop.f32.mrb[0].mxu0
    %v411 = vadd.f32 0.0, %v410
    %v412 = vpop.f32.mrb[0].mxu0
    %413 = vmatprep.mubr.f32.mxu0 0.0
    %414 = vmatmul.mubr.f32.gmra.mrb[0].mxu0 %v342
    %v415 = vpop.f32.mrb[0].mxu0
    %v416 = vadd.f32 0.0, %v415
    %v417 = vpop.f32.mrb[0].mxu0
    %418 = vdwg.mxu0
    %419 = vrot.lane.b32.xlu0 %v211, 120
    %v420 = vpop.permute.xlu0 %419
    %421 = vrot.lane.b32.xlu0 %v216, 120
    %v422 = vpop.permute.xlu0 %421
    %423 = vrot.lane.b32.xlu0 %v211, 88
    %v424 = vpop.permute.xlu0 %423
    %425 = vrot.lane.b32.xlu0 %v216, 88
    %v426 = vpop.permute.xlu0 %425
    %v427 = vsel %vm225, %v420, 0
    %v429 = vsel %vm225, %v422, 0
    %v431 = vsel %vm225, %v424, 0
    %v433 = vsel %vm225, %v426, 0
    %435 = vmatprep.subr.mxu0 0.0
    %436 = vmatpush1.xpose.msra.mxu0 %v431
    %437 = vmatprep.subr.mxu0 0.0
    %438 = vmatpush1.xpose.msra.mxu0 %v433
    %439 = vmatprep.subr.mxu0 0.0
    %440 = vmatpush1.xpose.msra.mxu0 0.0
    %441 = vmatprep.subr.mxu0 0.0
    %442 = vmatpush1.xpose.msra.mxu0 0.0
    %443 = vmatprep.subr.mxu0 0.0
    %444 = vmatpush1.xpose.msra.mxu0 0.0
    %445 = vmatprep.subr.mxu0 0.0
    %446 = vmatpush1.xpose.msra.mxu0 0.0
    %447 = vmatprep.subr.mxu0 0.0
    %448 = vmatpush1.xpose.msra.mxu0 0.0
    %449 = vmatprep.subr.mxu0 0.0
    %450 = vmatpush1.xpose.msra.mxu0 0.0
    %451 = vmatprep.subr.mxu0 0.0
    %452 = vmatpush1.xpose.msra.mxu0 0.0
    %453 = vmatprep.subr.mxu0 0.0
    %454 = vmatpush1.xpose.msra.mxu0 0.0
    %455 = vmatprep.subr.mxu0 0.0
    %456 = vmatpush1.xpose.msra.mxu0 0.0
    %457 = vmatprep.subr.mxu0 0.0
    %458 = vmatpush1.xpose.msra.mxu0 0.0
    %459 = vmatprep.subr.mxu0 0.0
    %460 = vmatpush1.xpose.msra.mxu0 0.0
    %461 = vmatprep.subr.mxu0 0.0
    %462 = vmatpush1.xpose.msra.mxu0 0.0
    %463 = vmatprep.subr.mxu0 0.0
    %464 = vmatpush1.xpose.msra.mxu0 0.0
    %465 = vmatprep.subr.mxu0 0.0
    %466 = vmatpush1.xpose.msra.mxu0 0.0
    %467 = vmatprep.subr.mxu0 0.0
    %468 = vmatpush1.xpose.msra.mxu0 0.0
    %469 = vmatprep.subr.mxu0 0.0
    %470 = vmatpush1.xpose.msra.mxu0 0.0
    %471 = vmatprep.subr.mxu0 0.0
    %472 = vmatpush1.xpose.msra.mxu0 0.0
    %473 = vmatprep.subr.mxu0 0.0
    %474 = vmatpush1.xpose.msra.mxu0 0.0
    %475 = vmatprep.subr.mxu0 0.0
    %476 = vmatpush1.xpose.msra.mxu0 0.0
    %477 = vmatprep.subr.mxu0 0.0
    %478 = vmatpush1.xpose.msra.mxu0 0.0
    %479 = vmatprep.subr.mxu0 0.0
    %480 = vmatpush1.xpose.msra.mxu0 0.0
    %481 = vmatprep.subr.mxu0 0.0
    %482 = vmatpush1.xpose.msra.mxu0 0.0
    %483 = vmatprep.subr.mxu0 0.0
    %484 = vmatpush1.xpose.msra.mxu0 0.0
    %485 = vmatprep.subr.mxu0 0.0
    %486 = vmatpush1.xpose.msra.mxu0 0.0
    %487 = vmatprep.subr.mxu0 0.0
    %488 = vmatpush1.xpose.msra.mxu0 0.0
    %489 = vmatprep.subr.mxu0 0.0
    %490 = vmatpush1.xpose.msra.mxu0 0.0
    %491 = vmatprep.subr.mxu0 0.0
    %492 = vmatpush1.xpose.msra.mxu0 0.0
    %493 = vmatprep.subr.mxu0 0.0
    %494 = vmatpush1.xpose.msra.mxu0 0.0
    %495 = vmatprep.subr.mxu0 0.0
    %496 = vmatpush1.xpose.msra.mxu0 0.0
    %497 = vmatprep.subr.mxu0 0.0
    %498 = vmatpush1.xpose.msra.mxu0 0.0
    %499 = vmatprep.mubr.f32.mxu0 0.0
    %500 = vmatmul.mubr.f32.gmra.mrb[0].mxu0 %v427
    %v501 = vpop.f32.mrb[0].mxu0
    %v502 = vadd.f32 %v77, %v501
    %v503 = vpop.f32.mrb[0].mxu0
    %504 = vmatprep.mubr.f32.mxu0 0.0
    %505 = vmatmul.mubr.f32.gmra.mrb[0].mxu0 %v429
    %v506 = vpop.f32.mrb[0].mxu0
    %v507 = vadd.f32 %v78, %v506
    %v508 = vpop.f32.mrb[0].mxu0
    %509 = vdwg.mxu0
    %v510 = vsel %vm309, %v502, -inf
    %511 = vmax.xlane.f32.xlu0 %v510
    %v512 = vpop.xlane.xlu0 %511
    %v513 = vsel %vm309, %v507, -inf
    %514 = vmax.xlane.f32.xlu0 %v513
    %v515 = vpop.xlane.xlu0 %514
    %v516 = vsub.f32 %v502, %v512
    %v517 = vsub.f32 %v507, %v515
    %v518 = vmul.f32 %v516, 1.442695
    %v519 = vpow.pop %v518
    %v520 = vmul.f32 %v517, 1.442695
    %v521 = vpow.pop %v520
    %v522 = vsel %vm309, %v519, 0.0
    %523 = vadd.xlane.f32.xlu0 %v522
    %v524 = vpop.xlane.xlu0 %523
    %v525 = vsel %vm309, %v521, 0.0
    %526 = vadd.xlane.f32.xlu0 %v525
    %v527 = vpop.xlane.xlu0 %526
    %v528 = vrcp.pop %v524
    %v529 = vrcp.pop %v527
    %v530 = vmul.f32 %v519, %v528
    %v531 = vmul.f32 %v521, %v529
    %532 = vrot.lane.b32.xlu0 %v211, 56
    %v533 = vpop.permute.xlu0 %532
    %534 = vrot.lane.b32.xlu0 %v216, 56
    %v535 = vpop.permute.xlu0 %534
    %v539 = vsel %vm309, %v530, 0
    %v542 = vsel %vm309, %v531, 0
    %544 = vmatprep.subr.mxu0 0.0
    %545 = vmatpush1.msra.mxu0 %v533
    %546 = vmatprep.subr.mxu0 0.0
    %547 = vmatpush1.msra.mxu0 %v535
    %548 = vmatprep.subr.mxu0 0.0
    %549 = vmatpush1.msra.mxu0 0.0
    %550 = vmatprep.subr.mxu0 0.0
    %551 = vmatpush1.msra.mxu0 0.0
    %552 = vmatprep.subr.mxu0 0.0
    %553 = vmatpush1.msra.mxu0 0.0
    %554 = vmatprep.subr.mxu0 0.0
    %555 = vmatpush1.msra.mxu0 0.0
    %556 = vmatprep.subr.mxu0 0.0
    %557 = vmatpush1.msra.mxu0 0.0
    %558 = vmatprep.subr.mxu0 0.0
    %559 = vmatpush1.msra.mxu0 0.0
    %560 = vmatprep.subr.mxu0 0.0
    %561 = vmatpush1.msra.mxu0 0.0
    %562 = vmatprep.subr.mxu0 0.0
    %563 = vmatpush1.msra.mxu0 0.0
    %564 = vmatprep.subr.mxu0 0.0
    %565 = vmatpush1.msra.mxu0 0.0
    %566 = vmatprep.subr.mxu0 0.0
    %567 = vmatpush1.msra.mxu0 0.0
    %568 = vmatprep.subr.mxu0 0.0
    %569 = vmatpush1.msra.mxu0 0.0
    %570 = vmatprep.subr.mxu0 0.0
    %571 = vmatpush1.msra.mxu0 0.0
    %572 = vmatprep.subr.mxu0 0.0
    %573 = vmatpush1.msra.mxu0 0.0
    %574 = vmatprep.subr.mxu0 0.0
    %575 = vmatpush1.msra.mxu0 0.0
    %576 = vmatprep.subr.mxu0 0.0
    %577 = vmatpush1.msra.mxu0 0.0
    %578 = vmatprep.subr.mxu0 0.0
    %579 = vmatpush1.msra.mxu0 0.0
    %580 = vmatprep.subr.mxu0 0.0
    %581 = vmatpush1.msra.mxu0 0.0
    %582 = vmatprep.subr.mxu0 0.0
    %583 = vmatpush1.msra.mxu0 0.0
    %584 = vmatprep.subr.mxu0 0.0
    %585 = vmatpush1.msra.mxu0 0.0
    %586 = vmatprep.subr.mxu0 0.0
    %587 = vmatpush1.msra.mxu0 0.0
    %588 = vmatprep.subr.mxu0 0.0
    %589 = vmatpush1.msra.mxu0 0.0
    %590 = vmatprep.subr.mxu0 0.0
    %591 = vmatpush1.msra.mxu0 0.0
    %592 = vmatprep.subr.mxu0 0.0
    %593 = vmatpush1.msra.mxu0 0.0
    %594 = vmatprep.subr.mxu0 0.0
    %595 = vmatpush1.msra.mxu0 0.0
    %596 = vmatprep.subr.mxu0 0.0
    %597 = vmatpush1.msra.mxu0 0.0
    %598 = vmatprep.subr.mxu0 0.0
    %599 = vmatpush1.msra.mxu0 0.0
    %600 = vmatprep.subr.mxu0 0.0
    %601 = vmatpush1.msra.mxu0 0.0
    %602 = vmatprep.subr.mxu0 0.0
    %603 = vmatpush1.msra.mxu0 0.0
    %604 = vmatprep.subr.mxu0 0.0
    %605 = vmatpush1.msra.mxu0 0.0
    %606 = vmatprep.subr.mxu0 0.0
    %607 = vmatpush1.msra.mxu0 0.0
    %608 = vmatprep.mubr.f32.mxu0 0.0
    %609 = vmatmul.mubr.f32.gmra.mrb[0].mxu0 %v539
    %v610 = vpop.f32.mrb[0].mxu0
    %v611 = vadd.f32 0.0, %v610
    %v612 = vpop.f32.mrb[0].mxu0
    %613 = vmatprep.mubr.f32.mxu0 0.0
    %614 = vmatmul.mubr.f32.gmra.mrb[0].mxu0 %v542
    %v615 = vpop.f32.mrb[0].mxu0
    %v616 = vadd.f32 0.0, %v615
    %v617 = vpop.f32.mrb[0].mxu0
    %618 = vdwg.mxu0
    %619 = vrot.lane.b32.xlu0 %v211, 112
    %v620 = vpop.permute.xlu0 %619
    %621 = vrot.lane.b32.xlu0 %v216, 112
    %v622 = vpop.permute.xlu0 %621
    %623 = vrot.lane.b32.xlu0 %v211, 80
    %v624 = vpop.permute.xlu0 %623
    %625 = vrot.lane.b32.xlu0 %v216, 80
    %v626 = vpop.permute.xlu0 %625
    %v627 = vsel %vm225, %v620, 0
    %v629 = vsel %vm225, %v622, 0
    %v631 = vsel %vm225, %v624, 0
    %v633 = vsel %vm225, %v626, 0
    %635 = vmatprep.subr.mxu0 0.0
    %636 = vmatpush1.xpose.msra.mxu0 %v631
    %637 = vmatprep.subr.mxu0 0.0
    %638 = vmatpush1.xpose.msra.mxu0 %v633
    %639 = vmatprep.subr.mxu0 0.0
    %640 = vmatpush1.xpose.msra.mxu0 0.0
    %641 = vmatprep.subr.mxu0 0.0
    %642 = vmatpush1.xpose.msra.mxu0 0.0
    %643 = vmatprep.subr.mxu0 0.0
    %644 = vmatpush1.xpose.msra.mxu0 0.0
    %645 = vmatprep.subr.mxu0 0.0
    %646 = vmatpush1.xpose.msra.mxu0 0.0
    %647 = vmatprep.subr.mxu0 0.0
    %648 = vmatpush1.xpose.msra.mxu0 0.0
    %649 = vmatprep.subr.mxu0 0.0
    %650 = vmatpush1.xpose.msra.mxu0 0.0
    %651 = vmatprep.subr.mxu0 0.0
    %652 = vmatpush1.xpose.msra.mxu0 0.0
    %653 = vmatprep.subr.mxu0 0.0
    %654 = vmatpush1.xpose.msra.mxu0 0.0
    %655 = vmatprep.subr.mxu0 0.0
    %656 = vmatpush1.xpose.msra.mxu0 0.0
    %657 = vmatprep.subr.mxu0 0.0
    %658 = vmatpush1.xpose.msra.mxu0 0.0
    %659 = vmatprep.subr.mxu0 0.0
    %660 = vmatpush1.xpose.msra.mxu0 0.0
    %661 = vmatprep.subr.mxu0 0.0
    %662 = vmatpush1.xpose.msra.mxu0 0.0
    %663 = vmatprep.subr.mxu0 0.0
    %664 = vmatpush1.xpose.msra.mxu0 0.0
    %665 = vmatprep.subr.mxu0 0.0
    %666 = vmatpush1.xpose.msra.mxu0 0.0
    %667 = vmatprep.subr.mxu0 0.0
    %668 = vmatpush1.xpose.msra.mxu0 0.0
    %669 = vmatprep.subr.mxu0 0.0
    %670 = vmatpush1.xpose.msra.mxu0 0.0
    %671 = vmatprep.subr.mxu0 0.0
    %672 = vmatpush1.xpose.msra.mxu0 0.0
    %673 = vmatprep.subr.mxu0 0.0
    %674 = vmatpush1.xpose.msra.mxu0 0.0
    %675 = vmatprep.subr.mxu0 0.0
    %676 = vmatpush1.xpose.msra.mxu0 0.0
    %677 = vmatprep.subr.mxu0 0.0
    %678 = vmatpush1.xpose.msra.mxu0 0.0
    %679 = vmatprep.subr.mxu0 0.0
    %680 = vmatpush1.xpose.msra.mxu0 0.0
    %681 = vmatprep.subr.mxu0 0.0
    %682 = vmatpush1.xpose.msra.mxu0 0.0
    %683 = vmatprep.subr.mxu0 0.0
    %684 = vmatpush1.xpose.msra.mxu0 0.0
    %685 = vmatprep.subr.mxu0 0.0
    %686 = vmatpush1.xpose.msra.mxu0 0.0
    %687 = vmatprep.subr.mxu0 0.0
    %688 = vmatpush1.xpose.msra.mxu0 0.0
    %689 = vmatprep.subr.mxu0 0.0
    %690 = vmatpush1.xpose.msra.mxu0 0.0
    %691 = vmatprep.subr.mxu0 0.0
    %692 = vmatpush1.xpose.msra.mxu0 0.0
    %693 = vmatprep.subr.mxu0 0.0
    %694 = vmatpush1.xpose.msra.mxu0 0.0
    %695 = vmatprep.subr.mxu0 0.0
    %696 = vmatpush1.xpose.msra.mxu0 0.0
    %697 = vmatprep.subr.mxu0 0.0
    %698 = vmatpush1.xpose.msra.mxu0 0.0
    %699 = vmatprep.mubr.f32.mxu0 0.0
    %700 = vmatmul.mubr.f32.gmra.mrb[0].mxu0 %v627
    %v701 = vpop.f32.mrb[0].mxu0
    %v702 = vadd.f32 %v77, %v701
    %v703 = vpop.f32.mrb[0].mxu0
    %704 = vmatprep.mubr.f32.mxu0 0.0
    %705 = vmatmul.mubr.f32.gmra.mrb[0].mxu0 %v629
    %v706 = vpop.f32.mrb[0].mxu0
    %v707 = vadd.f32 %v78, %v706
    %v708 = vpop.f32.mrb[0].mxu0
    %709 = vdwg.mxu0
    %v710 = vsel %vm309, %v702, -inf
    %711 = vmax.xlane.f32.xlu0 %v710
    %v712 = vpop.xlane.xlu0 %711
    %v713 = vsel %vm309, %v707, -inf
    %714 = vmax.xlane.f32.xlu0 %v713
    %v715 = vpop.xlane.xlu0 %714
    %v716 = vsub.f32 %v702, %v712
    %v717 = vsub.f32 %v707, %v715
    %v718 = vmul.f32 %v716, 1.442695
    %v719 = vpow.pop %v718
    %v720 = vmul.f32 %v717, 1.442695
    %v721 = vpow.pop %v720
    %v722 = vsel %vm309, %v719, 0.0
    %723 = vadd.xlane.f32.xlu0 %v722
    %v724 = vpop.xlane.xlu0 %723
    %v725 = vsel %vm309, %v721, 0.0
    %726 = vadd.xlane.f32.xlu0 %v725
    %v727 = vpop.xlane.xlu0 %726
    %v728 = vrcp.pop %v724
    %v729 = vrcp.pop %v727
    %v730 = vmul.f32 %v719, %v728
    %v731 = vmul.f32 %v721, %v729
    %732 = vrot.lane.b32.xlu0 %v211, 48
    %v733 = vpop.permute.xlu0 %732
    %734 = vrot.lane.b32.xlu0 %v216, 48
    %v735 = vpop.permute.xlu0 %734
    %v739 = vsel %vm309, %v730, 0
    %v742 = vsel %vm309, %v731, 0
    %744 = vmatprep.subr.mxu0 0.0
    %745 = vmatpush1.msra.mxu0 %v733
    %746 = vmatprep.subr.mxu0 0.0
    %747 = vmatpush1.msra.mxu0 %v735
    %748 = vmatprep.subr.mxu0 0.0
    %749 = vmatpush1.msra.mxu0 0.0
    %750 = vmatprep.subr.mxu0 0.0
    %751 = vmatpush1.msra.mxu0 0.0
    %752 = vmatprep.subr.mxu0 0.0
    %753 = vmatpush1.msra.mxu0 0.0
    %754 = vmatprep.subr.mxu0 0.0
    %755 = vmatpush1.msra.mxu0 0.0
    %756 = vmatprep.subr.mxu0 0.0
    %757 = vmatpush1.msra.mxu0 0.0
    %758 = vmatprep.subr.mxu0 0.0
    %759 = vmatpush1.msra.mxu0 0.0
    %760 = vmatprep.subr.mxu0 0.0
    %761 = vmatpush1.msra.mxu0 0.0
    %762 = vmatprep.subr.mxu0 0.0
    %763 = vmatpush1.msra.mxu0 0.0
    %764 = vmatprep.subr.mxu0 0.0
    %765 = vmatpush1.msra.mxu0 0.0
    %766 = vmatprep.subr.mxu0 0.0
    %767 = vmatpush1.msra.mxu0 0.0
    %768 = vmatprep.subr.mxu0 0.0
    %769 = vmatpush1.msra.mxu0 0.0
    %770 = vmatprep.subr.mxu0 0.0
    %771 = vmatpush1.msra.mxu0 0.0
    %772 = vmatprep.subr.mxu0 0.0
    %773 = vmatpush1.msra.mxu0 0.0
    %774 = vmatprep.subr.mxu0 0.0
    %775 = vmatpush1.msra.mxu0 0.0
    %776 = vmatprep.subr.mxu0 0.0
    %777 = vmatpush1.msra.mxu0 0.0
    %778 = vmatprep.subr.mxu0 0.0
    %779 = vmatpush1.msra.mxu0 0.0
    %780 = vmatprep.subr.mxu0 0.0
    %781 = vmatpush1.msra.mxu0 0.0
    %782 = vmatprep.subr.mxu0 0.0
    %783 = vmatpush1.msra.mxu0 0.0
    %784 = vmatprep.subr.mxu0 0.0
    %785 = vmatpush1.msra.mxu0 0.0
    %786 = vmatprep.subr.mxu0 0.0
    %787 = vmatpush1.msra.mxu0 0.0
    %788 = vmatprep.subr.mxu0 0.0
    %789 = vmatpush1.msra.mxu0 0.0
    %790 = vmatprep.subr.mxu0 0.0
    %791 = vmatpush1.msra.mxu0 0.0
    %792 = vmatprep.subr.mxu0 0.0
    %793 = vmatpush1.msra.mxu0 0.0
    %794 = vmatprep.subr.mxu0 0.0
    %795 = vmatpush1.msra.mxu0 0.0
    %796 = vmatprep.subr.mxu0 0.0
    %797 = vmatpush1.msra.mxu0 0.0
    %798 = vmatprep.subr.mxu0 0.0
    %799 = vmatpush1.msra.mxu0 0.0
    %800 = vmatprep.subr.mxu0 0.0
    %801 = vmatpush1.msra.mxu0 0.0
    %802 = vmatprep.subr.mxu0 0.0
    %803 = vmatpush1.msra.mxu0 0.0
    %804 = vmatprep.subr.mxu0 0.0
    %805 = vmatpush1.msra.mxu0 0.0
    %806 = vmatprep.subr.mxu0 0.0
    %807 = vmatpush1.msra.mxu0 0.0
    %808 = vmatprep.mubr.f32.mxu0 0.0
    %809 = vmatmul.mubr.f32.gmra.mrb[0].mxu0 %v739
    %v810 = vpop.f32.mrb[0].mxu0
    %v811 = vadd.f32 0.0, %v810
    %v812 = vpop.f32.mrb[0].mxu0
    %813 = vmatprep.mubr.f32.mxu0 0.0
    %814 = vmatmul.mubr.f32.gmra.mrb[0].mxu0 %v742
    %v815 = vpop.f32.mrb[0].mxu0
    %v816 = vadd.f32 0.0, %v815
    %v817 = vpop.f32.mrb[0].mxu0
    %818 = vdwg.mxu0
    %819 = vrot.lane.b32.xlu0 %v211, 104
    %v820 = vpop.permute.xlu0 %819
    %821 = vrot.lane.b32.xlu0 %v216, 104
    %v822 = vpop.permute.xlu0 %821
    %823 = vrot.lane.b32.xlu0 %v211, 72
    %v824 = vpop.permute.xlu0 %823
    %825 = vrot.lane.b32.xlu0 %v216, 72
    %v826 = vpop.permute.xlu0 %825
    %v827 = vsel %vm225, %v820, 0
    %v829 = vsel %vm225, %v822, 0
    %v831 = vsel %vm225, %v824, 0
    %v833 = vsel %vm225, %v826, 0
    %835 = vmatprep.subr.mxu0 0.0
    %836 = vmatpush1.xpose.msra.mxu0 %v831
    %837 = vmatprep.subr.mxu0 0.0
    %838 = vmatpush1.xpose.msra.mxu0 %v833
    %839 = vmatprep.subr.mxu0 0.0
    %840 = vmatpush1.xpose.msra.mxu0 0.0
    %841 = vmatprep.subr.mxu0 0.0
    %842 = vmatpush1.xpose.msra.mxu0 0.0
    %843 = vmatprep.subr.mxu0 0.0
    %844 = vmatpush1.xpose.msra.mxu0 0.0
    %845 = vmatprep.subr.mxu0 0.0
    %846 = vmatpush1.xpose.msra.mxu0 0.0
    %847 = vmatprep.subr.mxu0 0.0
    %848 = vmatpush1.xpose.msra.mxu0 0.0
    %849 = vmatprep.subr.mxu0 0.0
    %850 = vmatpush1.xpose.msra.mxu0 0.0
    %851 = vmatprep.subr.mxu0 0.0
    %852 = vmatpush1.xpose.msra.mxu0 0.0
    %853 = vmatprep.subr.mxu0 0.0
    %854 = vmatpush1.xpose.msra.mxu0 0.0
    %855 = vmatprep.subr.mxu0 0.0
    %856 = vmatpush1.xpose.msra.mxu0 0.0
    %857 = vmatprep.subr.mxu0 0.0
    %858 = vmatpush1.xpose.msra.mxu0 0.0
    %859 = vmatprep.subr.mxu0 0.0
    %860 = vmatpush1.xpose.msra.mxu0 0.0
    %861 = vmatprep.subr.mxu0 0.0
    %862 = vmatpush1.xpose.msra.mxu0 0.0
    %863 = vmatprep.subr.mxu0 0.0
    %864 = vmatpush1.xpose.msra.mxu0 0.0
    %865 = vmatprep.subr.mxu0 0.0
    %866 = vmatpush1.xpose.msra.mxu0 0.0
    %867 = vmatprep.subr.mxu0 0.0
    %868 = vmatpush1.xpose.msra.mxu0 0.0
    %869 = vmatprep.subr.mxu0 0.0
    %870 = vmatpush1.xpose.msra.mxu0 0.0
    %871 = vmatprep.subr.mxu0 0.0
    %872 = vmatpush1.xpose.msra.mxu0 0.0
    %873 = vmatprep.subr.mxu0 0.0
    %874 = vmatpush1.xpose.msra.mxu0 0.0
    %875 = vmatprep.subr.mxu0 0.0
    %876 = vmatpush1.xpose.msra.mxu0 0.0
    %877 = vmatprep.subr.mxu0 0.0
    %878 = vmatpush1.xpose.msra.mxu0 0.0
    %879 = vmatprep.subr.mxu0 0.0
    %880 = vmatpush1.xpose.msra.mxu0 0.0
    %881 = vmatprep.subr.mxu0 0.0
    %882 = vmatpush1.xpose.msra.mxu0 0.0
    %883 = vmatprep.subr.mxu0 0.0
    %884 = vmatpush1.xpose.msra.mxu0 0.0
    %885 = vmatprep.subr.mxu0 0.0
    %886 = vmatpush1.xpose.msra.mxu0 0.0
    %887 = vmatprep.subr.mxu0 0.0
    %888 = vmatpush1.xpose.msra.mxu0 0.0
    %889 = vmatprep.subr.mxu0 0.0
    %890 = vmatpush1.xpose.msra.mxu0 0.0
    %891 = vmatprep.subr.mxu0 0.0
    %892 = vmatpush1.xpose.msra.mxu0 0.0
    %893 = vmatprep.subr.mxu0 0.0
    %894 = vmatpush1.xpose.msra.mxu0 0.0
    %895 = vmatprep.subr.mxu0 0.0
    %896 = vmatpush1.xpose.msra.mxu0 0.0
    %897 = vmatprep.subr.mxu0 0.0
    %898 = vmatpush1.xpose.msra.mxu0 0.0
    %899 = vmatprep.mubr.f32.mxu0 0.0
    %900 = vmatmul.mubr.f32.gmra.mrb[0].mxu0 %v827
    %v901 = vpop.f32.mrb[0].mxu0
    %v902 = vadd.f32 %v77, %v901
    %v903 = vpop.f32.mrb[0].mxu0
    %904 = vmatprep.mubr.f32.mxu0 0.0
    %905 = vmatmul.mubr.f32.gmra.mrb[0].mxu0 %v829
    %v906 = vpop.f32.mrb[0].mxu0
    %v907 = vadd.f32 %v78, %v906
    %v908 = vpop.f32.mrb[0].mxu0
    %909 = vdwg.mxu0
    %v910 = vsel %vm309, %v902, -inf
    %911 = vmax.xlane.f32.xlu0 %v910
    %v912 = vpop.xlane.xlu0 %911
    %v913 = vsel %vm309, %v907, -inf
    %914 = vmax.xlane.f32.xlu0 %v913
    %v915 = vpop.xlane.xlu0 %914
    %v916 = vsub.f32 %v902, %v912
    %v917 = vsub.f32 %v907, %v915
    %v918 = vmul.f32 %v916, 1.442695
    %v919 = vpow.pop %v918
    %v920 = vmul.f32 %v917, 1.442695
    %v921 = vpow.pop %v920
    %v922 = vsel %vm309, %v919, 0.0
    %923 = vadd.xlane.f32.xlu0 %v922
    %v924 = vpop.xlane.xlu0 %923
    %v925 = vsel %vm309, %v921, 0.0
    %926 = vadd.xlane.f32.xlu0 %v925
    %v927 = vpop.xlane.xlu0 %926
    %v928 = vrcp.pop %v924
    %v929 = vrcp.pop %v927
    %v930 = vmul.f32 %v919, %v928
    %v931 = vmul.f32 %v921, %v929
    %932 = vrot.lane.b32.xlu0 %v211, 40
    %v933 = vpop.permute.xlu0 %932
    %934 = vrot.lane.b32.xlu0 %v216, 40
    %v935 = vpop.permute.xlu0 %934
    %v939 = vsel %vm309, %v930, 0
    %v942 = vsel %vm309, %v931, 0
    %944 = vmatprep.subr.mxu0 0.0
    %945 = vmatpush1.msra.mxu0 %v933
    %946 = vmatprep.subr.mxu0 0.0
    %947 = vmatpush1.msra.mxu0 %v935
    %948 = vmatprep.subr.mxu0 0.0
    %949 = vmatpush1.msra.mxu0 0.0
    %950 = vmatprep.subr.mxu0 0.0
    %951 = vmatpush1.msra.mxu0 0.0
    %952 = vmatprep.subr.mxu0 0.0
    %953 = vmatpush1.msra.mxu0 0.0
    %954 = vmatprep.subr.mxu0 0.0
    %955 = vmatpush1.msra.mxu0 0.0
    %956 = vmatprep.subr.mxu0 0.0
    %957 = vmatpush1.msra.mxu0 0.0
    %958 = vmatprep.subr.mxu0 0.0
    %959 = vmatpush1.msra.mxu0 0.0
    %960 = vmatprep.subr.mxu0 0.0
    %961 = vmatpush1.msra.mxu0 0.0
    %962 = vmatprep.subr.mxu0 0.0
    %963 = vmatpush1.msra.mxu0 0.0
    %964 = vmatprep.subr.mxu0 0.0
    %965 = vmatpush1.msra.mxu0 0.0
    %966 = vmatprep.subr.mxu0 0.0
    %967 = vmatpush1.msra.mxu0 0.0
    %968 = vmatprep.subr.mxu0 0.0
    %969 = vmatpush1.msra.mxu0 0.0
    %970 = vmatprep.subr.mxu0 0.0
    %971 = vmatpush1.msra.mxu0 0.0
    %972 = vmatprep.subr.mxu0 0.0
    %973 = vmatpush1.msra.mxu0 0.0
    %974 = vmatprep.subr.mxu0 0.0
    %975 = vmatpush1.msra.mxu0 0.0
    %976 = vmatprep.subr.mxu0 0.0
    %977 = vmatpush1.msra.mxu0 0.0
    %978 = vmatprep.subr.mxu0 0.0
    %979 = vmatpush1.msra.mxu0 0.0
    %980 = vmatprep.subr.mxu0 0.0
    %981 = vmatpush1.msra.mxu0 0.0
    %982 = vmatprep.subr.mxu0 0.0
    %983 = vmatpush1.msra.mxu0 0.0
    %984 = vmatprep.subr.mxu0 0.0
    %985 = vmatpush1.msra.mxu0 0.0
    %986 = vmatprep.subr.mxu0 0.0
    %987 = vmatpush1.msra.mxu0 0.0
    %988 = vmatprep.subr.mxu0 0.0
    %989 = vmatpush1.msra.mxu0 0.0
    %990 = vmatprep.subr.mxu0 0.0
    %991 = vmatpush1.msra.mxu0 0.0
    %992 = vmatprep.subr.mxu0 0.0
    %993 = vmatpush1.msra.mxu0 0.0
    %994 = vmatprep.subr.mxu0 0.0
    %995 = vmatpush1.msra.mxu0 0.0
    %996 = vmatprep.subr.mxu0 0.0
    %997 = vmatpush1.msra.mxu0 0.0
    %998 = vmatprep.subr.mxu0 0.0
    %999 = vmatpush1.msra.mxu0 0.0
    %1000 = vmatprep.subr.mxu0 0.0
    %1001 = vmatpush1.msra.mxu0 0.0
    %1002 = vmatprep.subr.mxu0 0.0
    %1003 = vmatpush1.msra.mxu0 0.0
    %1004 = vmatprep.subr.mxu0 0.0
    %1005 = vmatpush1.msra.mxu0 0.0
    %1006 = vmatprep.subr.mxu0 0.0
    %1007 = vmatpush1.msra.mxu0 0.0
    %1008 = vmatprep.mubr.f32.mxu0 0.0
    %1009 = vmatmul.mubr.f32.gmra.mrb[0].mxu0 %v939
    %v1010 = vpop.f32.mrb[0].mxu0
    %v1011 = vadd.f32 0.0, %v1010
    %v1012 = vpop.f32.mrb[0].mxu0
    %1013 = vmatprep.mubr.f32.mxu0 0.0
    %1014 = vmatmul.mubr.f32.gmra.mrb[0].mxu0 %v942
    %v1015 = vpop.f32.mrb[0].mxu0
    %v1016 = vadd.f32 0.0, %v1015
    %v1017 = vpop.f32.mrb[0].mxu0
    %1018 = vdwg.mxu0
    %1021 = vrot.lane.b32.xlu0 %v611, 8
    %v1022 = vpop.permute.xlu0 %1021
    %1023 = vrot.lane.b32.xlu0 %v616, 8
    %v1024 = vpop.permute.xlu0 %1023
    %1029 = vrot.lane.b32.xlu0 %v811, 16
    %v1030 = vpop.permute.xlu0 %1029
    %1031 = vrot.lane.b32.xlu0 %v816, 16
    %v1032 = vpop.permute.xlu0 %1031
    %1037 = vrot.lane.b32.xlu0 %v1011, 24
    %v1038 = vpop.permute.xlu0 %1037
    %1039 = vrot.lane.b32.xlu0 %v1016, 24
    %v1040 = vpop.permute.xlu0 %1039
    %v1043 = vsel %vm225, %v411, %v1022
    %v1044 = vsel %vm225, %v416, %v1024
    %v1045 = vsel %vm309, %v1043, %v1030
    %v1046 = vsel %vm309, %v1044, %v1032
    %vm1047 = vcmask 195584
    %v1048 = vsel %vm1047, %v1045, %v1038
    %v1049 = vsel %vm1047, %v1046, %v1040
    %1054 = vrot.lane.b32.xlu0 %v58, 32
    %v1055 = vpop.permute.xlu0 %1054
    %1056 = vrot.lane.b32.xlu0 %v59, 32
    %v1057 = vpop.permute.xlu0 %1056
    %1058 = vrot.lane.b32.xlu0 %v60, 32
    %v1059 = vpop.permute.xlu0 %1058
    %1060 = vrot.lane.b32.xlu0 %v61, 32
    %v1061 = vpop.permute.xlu0 %1060
    %1067 = vrot.lane.b32.xlu0 %v137, 32
    %v1068 = vpop.permute.xlu0 %1067
    %v1071 = vsel %vm79, %v1048, 0
    %v1074 = vsel %vm79, %v1049, 0
    %1076 = vmatprep.subr.mxu0 0.0
    %1077 = vmatpush1.msra.mxu0 %v1055
    %1078 = vmatprep.subr.mxu0 0.0
    %1079 = vmatpush1.msra.mxu0 %v1057
    %1080 = vmatprep.subr.mxu0 0.0
    %1081 = vmatpush1.msra.mxu0 %v1059
    %1082 = vmatprep.subr.mxu0 0.0
    %1083 = vmatpush1.msra.mxu0 %v1061
    %1084 = vmatprep.subr.mxu0 0.0
    %1085 = vmatpush1.msra.mxu0 0.0
    %1086 = vmatprep.subr.mxu0 0.0
    %1087 = vmatpush1.msra.mxu0 0.0
    %1088 = vmatprep.subr.mxu0 0.0
    %1089 = vmatpush1.msra.mxu0 0.0
    %1090 = vmatprep.subr.mxu0 0.0
    %1091 = vmatpush1.msra.mxu0 0.0
    %1092 = vmatprep.subr.mxu0 0.0
    %1093 = vmatpush1.msra.mxu0 0.0
    %1094 = vmatprep.subr.mxu0 0.0
    %1095 = vmatpush1.msra.mxu0 0.0
    %1096 = vmatprep.subr.mxu0 0.0
    %1097 = vmatpush1.msra.mxu0 0.0
    %1098 = vmatprep.subr.mxu0 0.0
    %1099 = vmatpush1.msra.mxu0 0.0
    %1100 = vmatprep.subr.mxu0 0.0
    %1101 = vmatpush1.msra.mxu0 0.0
    %1102 = vmatprep.subr.mxu0 0.0
    %1103 = vmatpush1.msra.mxu0 0.0
    %1104 = vmatprep.subr.mxu0 0.0
    %1105 = vmatpush1.msra.mxu0 0.0
    %1106 = vmatprep.subr.mxu0 0.0
    %1107 = vmatpush1.msra.mxu0 0.0
    %1108 = vmatprep.subr.mxu0 0.0
    %1109 = vmatpush1.msra.mxu0 0.0
    %1110 = vmatprep.subr.mxu0 0.0
    %1111 = vmatpush1.msra.mxu0 0.0
    %1112 = vmatprep.subr.mxu0 0.0
    %1113 = vmatpush1.msra.mxu0 0.0
    %1114 = vmatprep.subr.mxu0 0.0
    %1115 = vmatpush1.msra.mxu0 0.0
    %1116 = vmatprep.subr.mxu0 0.0
    %1117 = vmatpush1.msra.mxu0 0.0
    %1118 = vmatprep.subr.mxu0 0.0
    %1119 = vmatpush1.msra.mxu0 0.0
    %1120 = vmatprep.subr.mxu0 0.0
    %1121 = vmatpush1.msra.mxu0 0.0
    %1122 = vmatprep.subr.mxu0 0.0
    %1123 = vmatpush1.msra.mxu0 0.0
    %1124 = vmatprep.subr.mxu0 0.0
    %1125 = vmatpush1.msra.mxu0 0.0
    %1126 = vmatprep.subr.mxu0 0.0
    %1127 = vmatpush1.msra.mxu0 0.0
    %1128 = vmatprep.subr.mxu0 0.0
    %1129 = vmatpush1.msra.mxu0 0.0
    %1130 = vmatprep.subr.mxu0 0.0
    %1131 = vmatpush1.msra.mxu0 0.0
    %1132 = vmatprep.subr.mxu0 0.0
    %1133 = vmatpush1.msra.mxu0 0.0
    %1134 = vmatprep.subr.mxu0 0.0
    %1135 = vmatpush1.msra.mxu0 0.0
    %1136 = vmatprep.subr.mxu0 0.0
    %1137 = vmatpush1.msra.mxu0 0.0
    %1138 = vmatprep.subr.mxu0 0.0
    %1139 = vmatpush1.msra.mxu0 0.0
    %1140 = vmatprep.mubr.f32.mxu0 0.0
    %1141 = vmatmul.mubr.f32.gmra.mrb[0].mxu0 %v1071
    %v1142 = vpop.f32.mrb[0].mxu0
    %v1143 = vadd.f32 %v1068, %v1142
    %v1144 = vpop.f32.mrb[0].mxu0
    %1145 = vmatprep.mubr.f32.mxu0 0.0
    %1146 = vmatmul.mubr.f32.gmra.mrb[0].mxu0 %v1074
    %v1147 = vpop.f32.mrb[0].mxu0
    %v1148 = vadd.f32 %v1068, %v1147
    %v1149 = vpop.f32.mrb[0].mxu0
    %1150 = vdwg.mxu0
    %v1151 = vadd.f32 %v56, %v1143
    %v1152 = vadd.f32 %v57, %v1148
    %v1153 = vsel %vm79, %v1151, 0.0
    %1154 = vadd.xlane.f32.xlu0 %v1153
    %v1155 = vpop.xlane.xlu0 %1154
    %v1156 = vsel %vm79, %v1152, 0.0
    %1157 = vadd.xlane.f32.xlu0 %v1156
    %v1158 = vpop.xlane.xlu0 %1157
    %v1159 = vmul.f32 %v1155, %v86
    %v1160 = vmul.f32 %v1158, %v86
    %v1161 = vsub.f32 %v1151, %v1159
    %v1162 = vsub.f32 %v1152, %v1160
    %v1163 = vmul.f32 %v1161, %v1161
    %v1164 = vmul.f32 %v1162, %v1162
    %v1165 = vsel %vm79, %v1163, 0.0
    %1166 = vadd.xlane.f32.xlu0 %v1165
    %v1167 = vpop.xlane.xlu0 %1166
    %v1168 = vsel %vm79, %v1164, 0.0
    %1169 = vadd.xlane.f32.xlu0 %v1168
    %v1170 = vpop.xlane.xlu0 %1169
    %v1171 = vmul.f32 %v1167, %v99
    %v1172 = vmul.f32 %v1170, %v99
    %v1173 = vrsqrt.pop %v1171
    %v1174 = vmul.f32 %v1171, %v1173
    %vm1175 = vcmp.eq.f32.partialorder %v1171, inf
    %v1176 = vsel %vm1175, %v1171, %v1174
    %vm1177 = vcmp.eq.f32.partialorder %v1171, 0.0
    %v1178 = vand.u32 %v1171, 2147483648
    %v1179 = vsel %vm1177, %v1178, %v1176
    %v1180 = vrsqrt.pop %v1172
    %v1181 = vmul.f32 %v1172, %v1180
    %vm1182 = vcmp.eq.f32.partialorder %v1172, inf
    %v1183 = vsel %vm1182, %v1172, %v1181
    %vm1184 = vcmp.eq.f32.partialorder %v1172, 0.0
    %v1185 = vand.u32 %v1172, 2147483648
    %v1186 = vsel %vm1184, %v1185, %v1183
    %1189 = vrot.lane.b32.xlu0 %v1161, 64
    %v1190 = vpop.permute.xlu0 %1189
    %1191 = vrot.lane.b32.xlu0 %v1162, 64
    %v1192 = vpop.permute.xlu0 %1191
    %v1195 = vmul.f32 %v119, %v1190
    %v1196 = vmul.f32 %v119, %v1192
    %v1197 = vadd.f32 %v1179, 1e-06
    %v1198 = vadd.f32 %v1186, 1e-06
    %v1199 = vrcp.pop %v1197
    %v1200 = vrcp.pop %v1198
    %v1201 = vmul.f32 %v1195, %v1199
    %v1202 = vmul.f32 %v1196, %v1200
    %v1203 = vadd.f32 %v1201, %v130
    %v1204 = vadd.f32 %v1202, %v130
    %v1205 = vlaneseq
    %v1206 = vshrl.u32 %v1205, 7
    %v1207 = vsub.s32 0, %v1206
    %v1208 = vrot.slane %v76, %v1207
    %1211 = vrot.lane.b32.xlu0 %v1203, 64
    %v1212 = vpop.permute.xlu0 %1211
    %1213 = vrot.lane.b32.xlu0 %v1204, 64
    %v1214 = vpop.permute.xlu0 %1213
    %v1215 = vsel %vm79, %v1212, 0
    %v1217 = vsel %vm79, %v1214, 0
    %1219 = vmatprep.subr.mxu0 0.0
    %1220 = vmatpush1.msra.mxu0 %v62
    %1221 = vmatprep.subr.mxu0 0.0
    %1222 = vmatpush1.msra.mxu0 %v63
    %1223 = vmatprep.subr.mxu0 0.0
    %1224 = vmatpush1.msra.mxu0 %v64
    %1225 = vmatprep.subr.mxu0 0.0
    %1226 = vmatpush1.msra.mxu0 %v65
    %1227 = vmatprep.subr.mxu0 0.0
    %1228 = vmatpush1.msra.mxu0 0.0
    %1229 = vmatprep.subr.mxu0 0.0
    %1230 = vmatpush1.msra.mxu0 0.0
    %1231 = vmatprep.subr.mxu0 0.0
    %1232 = vmatpush1.msra.mxu0 0.0
    %1233 = vmatprep.subr.mxu0 0.0
    %1234 = vmatpush1.msra.mxu0 0.0
    %1235 = vmatprep.subr.mxu0 0.0
    %1236 = vmatpush1.msra.mxu0 0.0
    %1237 = vmatprep.subr.mxu0 0.0
    %1238 = vmatpush1.msra.mxu0 0.0
    %1239 = vmatprep.subr.mxu0 0.0
    %1240 = vmatpush1.msra.mxu0 0.0
    %1241 = vmatprep.subr.mxu0 0.0
    %1242 = vmatpush1.msra.mxu0 0.0
    %1243 = vmatprep.subr.mxu0 0.0
    %1244 = vmatpush1.msra.mxu0 0.0
    %1245 = vmatprep.subr.mxu0 0.0
    %1246 = vmatpush1.msra.mxu0 0.0
    %1247 = vmatprep.subr.mxu0 0.0
    %1248 = vmatpush1.msra.mxu0 0.0
    %1249 = vmatprep.subr.mxu0 0.0
    %1250 = vmatpush1.msra.mxu0 0.0
    %1251 = vmatprep.subr.mxu0 0.0
    %1252 = vmatpush1.msra.mxu0 0.0
    %1253 = vmatprep.subr.mxu0 0.0
    %1254 = vmatpush1.msra.mxu0 0.0
    %1255 = vmatprep.subr.mxu0 0.0
    %1256 = vmatpush1.msra.mxu0 0.0
    %1257 = vmatprep.subr.mxu0 0.0
    %1258 = vmatpush1.msra.mxu0 0.0
    %1259 = vmatprep.subr.mxu0 0.0
    %1260 = vmatpush1.msra.mxu0 0.0
    %1261 = vmatprep.subr.mxu0 0.0
    %1262 = vmatpush1.msra.mxu0 0.0
    %1263 = vmatprep.subr.mxu0 0.0
    %1264 = vmatpush1.msra.mxu0 0.0
    %1265 = vmatprep.subr.mxu0 0.0
    %1266 = vmatpush1.msra.mxu0 0.0
    %1267 = vmatprep.subr.mxu0 0.0
    %1268 = vmatpush1.msra.mxu0 0.0
    %1269 = vmatprep.subr.mxu0 0.0
    %1270 = vmatpush1.msra.mxu0 0.0
    %1271 = vmatprep.subr.mxu0 0.0
    %1272 = vmatpush1.msra.mxu0 0.0
    %1273 = vmatprep.subr.mxu0 0.0
    %1274 = vmatpush1.msra.mxu0 0.0
    %1275 = vmatprep.subr.mxu0 0.0
    %1276 = vmatpush1.msra.mxu0 0.0
    %1277 = vmatprep.subr.mxu0 0.0
    %1278 = vmatpush1.msra.mxu0 0.0
    %1279 = vmatprep.subr.mxu0 0.0
    %1280 = vmatpush1.msra.mxu0 0.0
    %1281 = vmatprep.subr.mxu0 0.0
    %1282 = vmatpush1.msra.mxu0 0.0
    %1283 = vmatprep.mubr.f32.mxu0 0.0
    %1284 = vmatmul.mubr.f32.gmra.mrb[0].mxu0 %v1215
    %v1285 = vpop.f32.mrb[0].mxu0
    %v1286 = vadd.f32 %v1208, %v1285
    %v1287 = vpop.f32.mrb[0].mxu0
    %1288 = vmatprep.mubr.f32.mxu0 0.0
    %1289 = vmatmul.mubr.f32.gmra.mrb[0].mxu0 %v1217
    %v1290 = vpop.f32.mrb[0].mxu0
    %v1291 = vadd.f32 %v1208, %v1290
    %v1292 = vpop.f32.mrb[0].mxu0
    %1293 = vdwg.mxu0
    %v1294 = vmax.f32 %v1286, 0.0
    %v1295 = vmax.f32 %v1291, 0.0
    %1304 = vrot.lane.b32.xlu0 %v66, 64
    %v1305 = vpop.permute.xlu0 %1304
    %1306 = vrot.lane.b32.xlu0 %v67, 64
    %v1307 = vpop.permute.xlu0 %1306
    %1308 = vrot.lane.b32.xlu0 %v68, 64
    %v1309 = vpop.permute.xlu0 %1308
    %1310 = vrot.lane.b32.xlu0 %v69, 64
    %v1311 = vpop.permute.xlu0 %1310
    %1312 = vrot.lane.b32.xlu0 %v70, 64
    %v1313 = vpop.permute.xlu0 %1312
    %1314 = vrot.lane.b32.xlu0 %v71, 64
    %v1315 = vpop.permute.xlu0 %1314
    %1316 = vrot.lane.b32.xlu0 %v72, 64
    %v1317 = vpop.permute.xlu0 %1316
    %1318 = vrot.lane.b32.xlu0 %v73, 64
    %v1319 = vpop.permute.xlu0 %1318
    %1329 = vrot.lane.b32.xlu0 %v1208, 64
    %v1330 = vpop.permute.xlu0 %1329
    %vm1332 = vcmask 523264
    %v1334 = vsel %vm1332, %v1294, 0
    %v1337 = vsel %vm1332, %v1295, 0
    %1339 = vmatprep.subr.mxu0 0.0
    %1340 = vmatpush1.msra.mxu0 %v1305
    %1341 = vmatprep.subr.mxu0 0.0
    %1342 = vmatpush1.msra.mxu0 %v1307
    %1343 = vmatprep.subr.mxu0 0.0
    %1344 = vmatpush1.msra.mxu0 %v1309
    %1345 = vmatprep.subr.mxu0 0.0
    %1346 = vmatpush1.msra.mxu0 %v1311
    %1347 = vmatprep.subr.mxu0 0.0
    %1348 = vmatpush1.msra.mxu0 %v1313
    %1349 = vmatprep.subr.mxu0 0.0
    %1350 = vmatpush1.msra.mxu0 %v1315
    %1351 = vmatprep.subr.mxu0 0.0
    %1352 = vmatpush1.msra.mxu0 %v1317
    %1353 = vmatprep.subr.mxu0 0.0
    %1354 = vmatpush1.msra.mxu0 %v1319
    %1355 = vmatprep.subr.mxu0 0.0
    %1356 = vmatpush1.msra.mxu0 0.0
    %1357 = vmatprep.subr.mxu0 0.0
    %1358 = vmatpush1.msra.mxu0 0.0
    %1359 = vmatprep.subr.mxu0 0.0
    %1360 = vmatpush1.msra.mxu0 0.0
    %1361 = vmatprep.subr.mxu0 0.0
    %1362 = vmatpush1.msra.mxu0 0.0
    %1363 = vmatprep.subr.mxu0 0.0
    %1364 = vmatpush1.msra.mxu0 0.0
    %1365 = vmatprep.subr.mxu0 0.0
    %1366 = vmatpush1.msra.mxu0 0.0
    %1367 = vmatprep.subr.mxu0 0.0
    %1368 = vmatpush1.msra.mxu0 0.0
    %1369 = vmatprep.subr.mxu0 0.0
    %1370 = vmatpush1.msra.mxu0 0.0
    %1371 = vmatprep.subr.mxu0 0.0
    %1372 = vmatpush1.msra.mxu0 0.0
    %1373 = vmatprep.subr.mxu0 0.0
    %1374 = vmatpush1.msra.mxu0 0.0
    %1375 = vmatprep.subr.mxu0 0.0
    %1376 = vmatpush1.msra.mxu0 0.0
    %1377 = vmatprep.subr.mxu0 0.0
    %1378 = vmatpush1.msra.mxu0 0.0
    %1379 = vmatprep.subr.mxu0 0.0
    %1380 = vmatpush1.msra.mxu0 0.0
    %1381 = vmatprep.subr.mxu0 0.0
    %1382 = vmatpush1.msra.mxu0 0.0
    %1383 = vmatprep.subr.mxu0 0.0
    %1384 = vmatpush1.msra.mxu0 0.0
    %1385 = vmatprep.subr.mxu0 0.0
    %1386 = vmatpush1.msra.mxu0 0.0
    %1387 = vmatprep.subr.mxu0 0.0
    %1388 = vmatpush1.msra.mxu0 0.0
    %1389 = vmatprep.subr.mxu0 0.0
    %1390 = vmatpush1.msra.mxu0 0.0
    %1391 = vmatprep.subr.mxu0 0.0
    %1392 = vmatpush1.msra.mxu0 0.0
    %1393 = vmatprep.subr.mxu0 0.0
    %1394 = vmatpush1.msra.mxu0 0.0
    %1395 = vmatprep.subr.mxu0 0.0
    %1396 = vmatpush1.msra.mxu0 0.0
    %1397 = vmatprep.subr.mxu0 0.0
    %1398 = vmatpush1.msra.mxu0 0.0
    %1399 = vmatprep.subr.mxu0 0.0
    %1400 = vmatpush1.msra.mxu0 0.0
    %1401 = vmatprep.subr.mxu0 0.0
    %1402 = vmatpush1.msra.mxu0 0.0
    %1403 = vmatprep.mubr.f32.mxu0 0.0
    %1404 = vmatmul.mubr.f32.gmra.mrb[0].mxu0 %v1334
    %v1405 = vpop.f32.mrb[0].mxu0
    %v1406 = vadd.f32 %v1330, %v1405
    %v1407 = vpop.f32.mrb[0].mxu0
    %1408 = vmatprep.mubr.f32.mxu0 0.0
    %1409 = vmatmul.mubr.f32.gmra.mrb[0].mxu0 %v1337
    %v1410 = vpop.f32.mrb[0].mxu0
    %v1411 = vadd.f32 %v1330, %v1410
    %v1412 = vpop.f32.mrb[0].mxu0
    %1413 = vdwg.mxu0
    %v1414 = vadd.f32 %v1151, %v1406
    %v1415 = vadd.f32 %v1152, %v1411
    %1416 = vst.msk [vmem:[#allocation8] sm:$0xff] %vm79, %v1414
    %1417 = vst.msk [vmem:[#allocation8 + $0x8] sm:$0xff] %vm79, %v1415
    // Predicated region
    $region26: #{tpu_custom_call.1} parent=1 // pred_check
      _
    $region27: #{tpu_custom_call.1} parent=1 // pred_check_branch
      %1419 = sbr.rel (0) target = $region29
    $region28: #{tpu_custom_call.1} parent=1 // pred_region
      %s1421 = ssub.s32 256, 256
      %1422 = vsyncadd [#allocation4], %s1421
      %s1423 = sshll.u32 [#allocation8], 4
      %s1424 = int_to_ptr.vmem [resolvable:$true] %s1423
      %1429 = dma.vmem_to_hbm [thread:$0]  %s1424, 256, %s3, [#allocation4], 128, 128, 8
    $region29: #{tpu_custom_call.1} parent=1 // pred_fallthru
      _
    // Predicated region
    $region30: #{tpu_custom_call.1} parent=1 // pred_check
      _
    $region31: #{tpu_custom_call.1} parent=1 // pred_check_branch
      %1431 = sbr.rel (0) target = $region33
    $region32: #{tpu_custom_call.1} parent=1 // pred_region
      %1432 = dma.done [#allocation4], 256
    $region33: #{tpu_custom_call.1} parent=1 // pred_fallthru
      _
    %1433 = vsyncpa [#allocation3], 1
    %1434 = vsyncpa [#allocation6], 1
    %1435 = vsyncpa [#allocation4], 1

</llo_original>
